<compile_context>
chip_gen: v6e
topology: v6e:2x2x1
jax: 0.10.0
libtpu: 0.0.40
codegen_flags: <defaults>
</compile_context>

<pallas_src>
import functools

import jax
import jax.numpy as jnp
from jax.experimental import pallas as pl
from jax.experimental.pallas import tpu as pltpu


# ----------------------------- fused kernel -------------------------------- #

def _transition_up_kernel(x_ref, pos_ref, xsub_ref, possub_ref,
                          w1_ref, s1_ref, w2_ref, s2_ref, o_ref, *, k):
    # 1) sub-branch MLP (BN/bias folded):  xs = relu(x_sub @ W1' + shift1')
    #    Recomputed per query tile (tiny (Ns,Cin)@(Cin,Cout) matmul); keeps the
    #    grid axis fully "parallel" (megacore-safe, no scratch-init gating).
    xs = jnp.dot(xsub_ref[...], w1_ref[...], preferred_element_type=jnp.float32)
    xs = jnp.maximum(xs + s1_ref[...], 0.0)                          # (Ns, Cout)

    # 2) squared distances on the MXU: d2 = |p|^2 + |q|^2 - 2 p.q^T
    pos = pos_ref[...]                                               # (TQ, 3)
    psub = possub_ref[...]                                           # (Ns, 3)
    pq = jax.lax.dot_general(pos, psub, (((1,), (1,)), ((), ())),
                             preferred_element_type=jnp.float32)     # (TQ, Ns)
    pn = jnp.sum(pos * pos, axis=-1, keepdims=True)                  # (TQ, 1)
    qn = jax.lax.dot_general(jnp.ones((1, 3), jnp.float32), psub * psub,
                             (((1,), (1,)), ((), ())),
                             preferred_element_type=jnp.float32)     # (1, Ns)
    d2 = jnp.maximum(pn + qn - 2.0 * pq, 0.0)                        # (TQ, Ns)

    # 3) k-nearest selection (k=3, unrolled): build sparse inverse-d^2 weights.
    TQ, Ns = d2.shape
    col = jax.lax.broadcasted_iota(jnp.int32, (TQ, Ns), 1)
    wmat = jnp.zeros((TQ, Ns), jnp.float32)
    for _ in range(k):
        m = jnp.min(d2, axis=-1, keepdims=True)                      # current min
        is_min = d2 == m
        first = jnp.min(jnp.where(is_min, col, Ns), axis=-1, keepdims=True)
        sel = col == first                                           # one per row
        w = 1.0 / jnp.maximum(m, 1e-16)
        wmat = wmat + jnp.where(sel, w, 0.0)
        d2 = jnp.where(sel, jnp.inf, d2)                             # exclude next round

    # 4) weighted interpolation (MXU) + EUP reciprocal for the normalization.
    num = jnp.dot(wmat, xs, preferred_element_type=jnp.float32)      # (TQ, Cout)
    den = jnp.sum(wmat, axis=-1, keepdims=True)                      # (TQ, 1)
    x_int = num * pl.reciprocal(den, approx=True)

    # 5) main-branch MLP (BN/bias folded) + fused residual add.
    y = jnp.dot(x_ref[...], w2_ref[...], preferred_element_type=jnp.float32)
    o_ref[...] = jnp.maximum(y + s2_ref[...], 0.0) + x_int


# ------------------------------- wrapper ------------------------------------ #

def fold_linear_bn(w, b, gamma, beta, mean, var, eps=1e-5):
    """Fold eval-mode BatchNorm into the linear layer: y = x @ W' + b'."""
    scale = gamma / jnp.sqrt(var + eps)
    shift = beta - mean * scale
    w_f = (w * scale[None, :]).astype(jnp.float32)
    b_f = (b * scale + shift)[None, :].astype(jnp.float32)
    return w_f, b_f


def _round_up(a, m):
    return ((a + m - 1) // m) * m


def transition_up_forward(x, x_sub, pos, pos_sub, params, *, tq=256, eps=1e-5):
    N, c_out = x.shape
    ns, c_in = x_sub.shape
    assert pos.shape == (N, 3) and pos_sub.shape == (ns, 3)
    assert ns >= 3, "knn_interpolate with k=3 needs at least 3 source points"

    w1f, s1 = fold_linear_bn(params["w1"], params["b1"], params["gamma1"],
                             params["beta1"], params["mean1"], params["var1"], eps)
    w2f, s2 = fold_linear_bn(params["w2"], params["b2"], params["gamma2"],
                             params["beta2"], params["mean2"], params["var2"], eps)

    # Tile the query axis; pad N up so the grid covers every point (tail-safe).
    tq_eff = max(8, min(_round_up(tq, 8), _round_up(N, 8)))
    n_pad = _round_up(N, tq_eff)
    if n_pad != N:
        x_p = jnp.zeros((n_pad, c_out), jnp.float32).at[:N].set(x)
        pos_p = jnp.zeros((n_pad, 3), jnp.float32).at[:N].set(pos)
    else:
        x_p, pos_p = x, pos

    out = pl.pallas_call(
        functools.partial(_transition_up_kernel, k=3),
        out_shape=jax.ShapeDtypeStruct((n_pad, c_out), jnp.float32),
        grid_spec=pltpu.PrefetchScalarGridSpec(
            num_scalar_prefetch=0,
            grid=(n_pad // tq_eff,),
            in_specs=[
                pl.BlockSpec((tq_eff, c_out), lambda i: (i, 0)),   # x (query features)
                pl.BlockSpec((tq_eff, 3), lambda i: (i, 0)),       # pos (query positions)
                pl.BlockSpec((ns, c_in), lambda i: (0, 0)),        # x_sub (resident)
                pl.BlockSpec((ns, 3), lambda i: (0, 0)),           # pos_sub (resident)
                pl.BlockSpec((c_in, c_out), lambda i: (0, 0)),     # folded W1
                pl.BlockSpec((1, c_out), lambda i: (0, 0)),        # folded shift1
                pl.BlockSpec((c_out, c_out), lambda i: (0, 0)),    # folded W2
                pl.BlockSpec((1, c_out), lambda i: (0, 0)),        # folded shift2
            ],
            out_specs=pl.BlockSpec((tq_eff, c_out), lambda i: (i, 0)),
        ),
        compiler_params=pltpu.CompilerParams(
            dimension_semantics=("parallel",),
        ),
    )(x_p, pos_p, x_sub, pos_sub, w1f, s1, w2f, s2)
    return out[:N]


# ------------------------------ reference ----------------------------------- #

def ref_forward(x, x_sub, pos, pos_sub, params, eps=1e-5):
    p = params

    def mlp(h, W, b, gamma, beta, mean, var):
        y = h @ W + b
        y = (y - mean) / jnp.sqrt(var + eps) * gamma + beta
        return jnp.maximum(y, 0.0)

    xs = mlp(x_sub, p["w1"], p["b1"], p["gamma1"], p["beta1"], p["mean1"], p["var1"])
    d2 = jnp.sum((pos[:, None, :] - pos_sub[None, :, :]) ** 2, axis=-1)
    idx = jnp.argsort(d2, axis=-1)[:, :3]
    d2k = jnp.take_along_axis(d2, idx, axis=-1)
    w = 1.0 / jnp.clip(d2k, 1e-16)
    fk = xs[idx]                                          # (N, 3, C)
    x_int = jnp.sum(w[..., None] * fk, axis=1) / jnp.sum(w, axis=1, keepdims=True)
    return mlp(x, p["w2"], p["b2"], p["gamma2"], p["beta2"], p["mean2"], p["var2"]) + x_int


# --------------------------------- main -------------------------------------- #

if __name__ == "__main__":
    N, N_SUB = 64, 16          # fine / coarse point counts
    C_IN, C_OUT = 32, 16       # in_channels / out_channels

    key = jax.random.PRNGKey(0)
    keys = jax.random.split(key, 12)

    x = jax.random.normal(keys[0], (N, C_OUT), jnp.float32)
    x_sub = jax.random.normal(keys[1], (N_SUB, C_IN), jnp.float32)
    pos = jax.random.uniform(keys[2], (N, 3), jnp.float32)
    pos_sub = jax.random.uniform(keys[3], (N_SUB, 3), jnp.float32)

    params = {
        # mlp_sub: Linear(C_IN -> C_OUT) + BN(C_OUT) + ReLU
        "w1": jax.random.normal(keys[4], (C_IN, C_OUT), jnp.float32) * 0.1,
        "b1": jax.random.normal(keys[5], (C_OUT,), jnp.float32) * 0.1,
        "gamma1": 1.0 + 0.1 * jax.random.normal(keys[6], (C_OUT,), jnp.float32),
        "beta1": 0.1 * jax.random.normal(keys[7], (C_OUT,), jnp.float32),
        "mean1": 0.05 * jnp.arange(C_OUT, dtype=jnp.float32),
        "var1": 1.0 + 0.01 * jnp.arange(C_OUT, dtype=jnp.float32),
        # mlp: Linear(C_OUT -> C_OUT) + BN(C_OUT) + ReLU
        "w2": jax.random.normal(keys[8], (C_OUT, C_OUT), jnp.float32) * 0.1,
        "b2": jax.random.normal(keys[9], (C_OUT,), jnp.float32) * 0.1,
        "gamma2": 1.0 + 0.1 * jax.random.normal(keys[10], (C_OUT,), jnp.float32),
        "beta2": 0.1 * jax.random.normal(keys[11], (C_OUT,), jnp.float32),
        "mean2": 0.03 * jnp.arange(C_OUT, dtype=jnp.float32),
        "var2": 1.0 + 0.02 * jnp.arange(C_OUT, dtype=jnp.float32),
    }

    out = transition_up_forward(x, x_sub, pos, pos_sub, params, tq=256)
    out = jax.block_until_ready(out)

    ref = ref_forward(x, x_sub, pos, pos_sub, params)
    assert out.shape == (N, C_OUT)
    # Tolerance accounts for the approximate EUP reciprocal used for the
    # interpolation normalization and the MXU-form distance computation.
    assert jnp.allclose(out, ref, rtol=5e-3, atol=5e-3), (
        f"max abs err {jnp.max(jnp.abs(out - ref))}")

    print("KERNEL_OK")
</pallas_src>

<mosaic_0001>
module attributes {stable_mosaic.version = 11 : i64} {
  func.func @_transition_up_kernel(%arg0: i32, %arg1: memref<64x16xf32, #tpu.memory_space<vmem>>, %arg2: memref<64x3xf32, #tpu.memory_space<vmem>>, %arg3: memref<16x32xf32, #tpu.memory_space<vmem>>, %arg4: memref<16x3xf32, #tpu.memory_space<vmem>>, %arg5: memref<32x16xf32, #tpu.memory_space<vmem>>, %arg6: memref<1x16xf32, #tpu.memory_space<vmem>>, %arg7: memref<16x16xf32, #tpu.memory_space<vmem>>, %arg8: memref<1x16xf32, #tpu.memory_space<vmem>>, %arg9: memref<64x16xf32, #tpu.memory_space<vmem>>) attributes {dimension_semantics = [#tpu.dimension_semantics<parallel>], iteration_bounds = array<i64: 1>, scalar_prefetch = 0 : i64, scratch_operands = 0 : i64, tpu.core_type = #tpu.core_type<tc>, window_params = [{transform_indices = @transform_0, window_bounds = array<i64: 64, 16>}, {transform_indices = @transform_1, window_bounds = array<i64: 64, 3>}, {pipeline_mode = #tpu.pipeline_mode<synchronous>, transform_indices = @transform_2, window_bounds = array<i64: 16, 32>}, {pipeline_mode = #tpu.pipeline_mode<synchronous>, transform_indices = @transform_3, window_bounds = array<i64: 16, 3>}, {pipeline_mode = #tpu.pipeline_mode<synchronous>, transform_indices = @transform_4, window_bounds = array<i64: 32, 16>}, {pipeline_mode = #tpu.pipeline_mode<synchronous>, transform_indices = @transform_5, window_bounds = array<i64: 1, 16>}, {pipeline_mode = #tpu.pipeline_mode<synchronous>, transform_indices = @transform_6, window_bounds = array<i64: 16, 16>}, {pipeline_mode = #tpu.pipeline_mode<synchronous>, transform_indices = @transform_7, window_bounds = array<i64: 1, 16>}, {transform_indices = @transform_8, window_bounds = array<i64: 64, 16>}]} {
    %c0 = arith.constant 0 : index
    %c0_0 = arith.constant 0 : index
    %0 = vector.load %arg3[%c0, %c0_0] : memref<16x32xf32, #tpu.memory_space<vmem>>, vector<16x32xf32>
    %c0_1 = arith.constant 0 : index
    %c0_2 = arith.constant 0 : index
    %1 = vector.load %arg5[%c0_1, %c0_2] : memref<32x16xf32, #tpu.memory_space<vmem>>, vector<32x16xf32>
    %cst = arith.constant dense<0.000000e+00> : vector<16x16xf32>
    %2 = tpu.matmul %0, %1, %cst {dimension_numbers = #tpu.dot_dimension_numbers<[1], [0], [0], [1], [0, 0, 1, 1], [], []>} : vector<16x32xf32>, vector<32x16xf32>, vector<16x16xf32> -> vector<16x16xf32>
    %c0_3 = arith.constant 0 : index
    %c0_4 = arith.constant 0 : index
    %3 = vector.load %arg6[%c0_3, %c0_4] : memref<1x16xf32, #tpu.memory_space<vmem>>, vector<1x16xf32>
    %4 = vector.broadcast %3 : vector<1x16xf32> to vector<16x16xf32>
    %5 = arith.addf %2, %4 : vector<16x16xf32>
    %cst_5 = arith.constant 0.000000e+00 : f32
    %6 = vector.broadcast %cst_5 : f32 to vector<16x16xf32>
    %7 = arith.maximumf %5, %6 : vector<16x16xf32>
    %c0_6 = arith.constant 0 : index
    %c0_7 = arith.constant 0 : index
    %8 = vector.load %arg2[%c0_6, %c0_7] : memref<64x3xf32, #tpu.memory_space<vmem>>, vector<64x3xf32>
    %c0_8 = arith.constant 0 : index
    %c0_9 = arith.constant 0 : index
    %9 = vector.load %arg4[%c0_8, %c0_9] : memref<16x3xf32, #tpu.memory_space<vmem>>, vector<16x3xf32>
    %cst_10 = arith.constant dense<0.000000e+00> : vector<64x16xf32>
    %10 = tpu.matmul %8, %9, %cst_10 {dimension_numbers = #tpu.dot_dimension_numbers<[1], [1], [0], [0], [0, 0, 1, 0], [], []>} : vector<64x3xf32>, vector<16x3xf32>, vector<64x16xf32> -> vector<64x16xf32>
    %11 = arith.mulf %8, %8 : vector<64x3xf32>
    %cst_11 = arith.constant dense<0.000000e+00> : vector<64xf32>
    %12 = vector.multi_reduction <add>, %11, %cst_11 [1] : vector<64x3xf32> to vector<64xf32>
    %13 = vector.shape_cast %12 : vector<64xf32> to vector<64x1xf32>
    %cst_12 = arith.constant 1.000000e+00 : f32
    %14 = vector.broadcast %cst_12 : f32 to vector<1x3xf32>
    %15 = arith.mulf %9, %9 : vector<16x3xf32>
    %cst_13 = arith.constant dense<0.000000e+00> : vector<1x16xf32>
    %16 = tpu.matmul %14, %15, %cst_13 {dimension_numbers = #tpu.dot_dimension_numbers<[1], [1], [0], [0], [0, 0, 1, 0], [], []>} : vector<1x3xf32>, vector<16x3xf32>, vector<1x16xf32> -> vector<1x16xf32>
    %17 = vector.broadcast %13 : vector<64x1xf32> to vector<64x16xf32>
    %18 = vector.broadcast %16 : vector<1x16xf32> to vector<64x16xf32>
    %19 = arith.addf %17, %18 : vector<64x16xf32>
    %cst_14 = arith.constant 2.000000e+00 : f32
    %20 = vector.broadcast %cst_14 : f32 to vector<64x16xf32>
    %21 = arith.mulf %20, %10 : vector<64x16xf32>
    %22 = arith.subf %19, %21 : vector<64x16xf32>
    %cst_15 = arith.constant 0.000000e+00 : f32
    %23 = vector.broadcast %cst_15 : f32 to vector<64x16xf32>
    %24 = arith.maximumf %22, %23 : vector<64x16xf32>
    %25 = tpu.iota {dimensions = array<i32: 1>} : vector<64x16xi32>
    %cst_16 = arith.constant 0.000000e+00 : f32
    %26 = vector.broadcast %cst_16 : f32 to vector<64x16xf32>
    %cst_17 = arith.constant dense<0x7F800000> : vector<64xf32>
    %27 = vector.multi_reduction <minimumf>, %24, %cst_17 [1] : vector<64x16xf32> to vector<64xf32>
    %28 = vector.shape_cast %27 : vector<64xf32> to vector<64x1xf32>
    %29 = vector.broadcast %28 : vector<64x1xf32> to vector<64x16xf32>
    %30 = arith.cmpf oeq, %24, %29 : vector<64x16xf32>
    %c16_i32 = arith.constant 16 : i32
    %31 = vector.broadcast %c16_i32 : i32 to vector<64x16xi32>
    %32 = arith.select %30, %25, %31 : vector<64x16xi1>, vector<64x16xi32>
    %cst_18 = arith.constant dense<2147483647> : vector<64xi32>
    %33 = vector.multi_reduction <minsi>, %32, %cst_18 [1] : vector<64x16xi32> to vector<64xi32>
    %34 = vector.shape_cast %33 : vector<64xi32> to vector<64x1xi32>
    %35 = vector.broadcast %34 : vector<64x1xi32> to vector<64x16xi32>
    %36 = arith.cmpi eq, %25, %35 : vector<64x16xi32>
    %cst_19 = arith.constant 1.000000e-16 : f32
    %37 = vector.broadcast %cst_19 : f32 to vector<64x1xf32>
    %38 = arith.maximumf %28, %37 : vector<64x1xf32>
    %cst_20 = arith.constant 1.000000e+00 : f32
    %39 = vector.broadcast %cst_20 : f32 to vector<64x1xf32>
    %40 = arith.divf %39, %38 : vector<64x1xf32>
    %cst_21 = arith.constant 0.000000e+00 : f32
    %41 = vector.shape_cast %40 : vector<64x1xf32> to vector<64x1xf32>
    %42 = vector.broadcast %41 : vector<64x1xf32> to vector<64x16xf32>
    %43 = vector.broadcast %cst_21 : f32 to vector<64x16xf32>
    %44 = arith.select %36, %42, %43 : vector<64x16xi1>, vector<64x16xf32>
    %45 = arith.addf %26, %44 : vector<64x16xf32>
    %cst_22 = arith.constant 0x7F800000 : f32
    %46 = vector.broadcast %cst_22 : f32 to vector<64x16xf32>
    %47 = arith.select %36, %46, %24 : vector<64x16xi1>, vector<64x16xf32>
    %cst_23 = arith.constant dense<0x7F800000> : vector<64xf32>
    %48 = vector.multi_reduction <minimumf>, %47, %cst_23 [1] : vector<64x16xf32> to vector<64xf32>
    %49 = vector.shape_cast %48 : vector<64xf32> to vector<64x1xf32>
    %50 = vector.broadcast %49 : vector<64x1xf32> to vector<64x16xf32>
    %51 = arith.cmpf oeq, %47, %50 : vector<64x16xf32>
    %c16_i32_24 = arith.constant 16 : i32
    %52 = vector.broadcast %c16_i32_24 : i32 to vector<64x16xi32>
    %53 = arith.select %51, %25, %52 : vector<64x16xi1>, vector<64x16xi32>
    %cst_25 = arith.constant dense<2147483647> : vector<64xi32>
    %54 = vector.multi_reduction <minsi>, %53, %cst_25 [1] : vector<64x16xi32> to vector<64xi32>
    %55 = vector.shape_cast %54 : vector<64xi32> to vector<64x1xi32>
    %56 = vector.broadcast %55 : vector<64x1xi32> to vector<64x16xi32>
    %57 = arith.cmpi eq, %25, %56 : vector<64x16xi32>
    %cst_26 = arith.constant 1.000000e-16 : f32
    %58 = vector.broadcast %cst_26 : f32 to vector<64x1xf32>
    %59 = arith.maximumf %49, %58 : vector<64x1xf32>
    %cst_27 = arith.constant 1.000000e+00 : f32
    %60 = vector.broadcast %cst_27 : f32 to vector<64x1xf32>
    %61 = arith.divf %60, %59 : vector<64x1xf32>
    %cst_28 = arith.constant 0.000000e+00 : f32
    %62 = vector.shape_cast %61 : vector<64x1xf32> to vector<64x1xf32>
    %63 = vector.broadcast %62 : vector<64x1xf32> to vector<64x16xf32>
    %64 = vector.broadcast %cst_28 : f32 to vector<64x16xf32>
    %65 = arith.select %57, %63, %64 : vector<64x16xi1>, vector<64x16xf32>
    %66 = arith.addf %45, %65 : vector<64x16xf32>
    %cst_29 = arith.constant 0x7F800000 : f32
    %67 = vector.broadcast %cst_29 : f32 to vector<64x16xf32>
    %68 = arith.select %57, %67, %47 : vector<64x16xi1>, vector<64x16xf32>
    %cst_30 = arith.constant dense<0x7F800000> : vector<64xf32>
    %69 = vector.multi_reduction <minimumf>, %68, %cst_30 [1] : vector<64x16xf32> to vector<64xf32>
    %70 = vector.shape_cast %69 : vector<64xf32> to vector<64x1xf32>
    %71 = vector.broadcast %70 : vector<64x1xf32> to vector<64x16xf32>
    %72 = arith.cmpf oeq, %68, %71 : vector<64x16xf32>
    %c16_i32_31 = arith.constant 16 : i32
    %73 = vector.broadcast %c16_i32_31 : i32 to vector<64x16xi32>
    %74 = arith.select %72, %25, %73 : vector<64x16xi1>, vector<64x16xi32>
    %cst_32 = arith.constant dense<2147483647> : vector<64xi32>
    %75 = vector.multi_reduction <minsi>, %74, %cst_32 [1] : vector<64x16xi32> to vector<64xi32>
    %76 = vector.shape_cast %75 : vector<64xi32> to vector<64x1xi32>
    %77 = vector.broadcast %76 : vector<64x1xi32> to vector<64x16xi32>
    %78 = arith.cmpi eq, %25, %77 : vector<64x16xi32>
    %cst_33 = arith.constant 1.000000e-16 : f32
    %79 = vector.broadcast %cst_33 : f32 to vector<64x1xf32>
    %80 = arith.maximumf %70, %79 : vector<64x1xf32>
    %cst_34 = arith.constant 1.000000e+00 : f32
    %81 = vector.broadcast %cst_34 : f32 to vector<64x1xf32>
    %82 = arith.divf %81, %80 : vector<64x1xf32>
    %cst_35 = arith.constant 0.000000e+00 : f32
    %83 = vector.shape_cast %82 : vector<64x1xf32> to vector<64x1xf32>
    %84 = vector.broadcast %83 : vector<64x1xf32> to vector<64x16xf32>
    %85 = vector.broadcast %cst_35 : f32 to vector<64x16xf32>
    %86 = arith.select %78, %84, %85 : vector<64x16xi1>, vector<64x16xf32>
    %87 = arith.addf %66, %86 : vector<64x16xf32>
    %cst_36 = arith.constant dense<0.000000e+00> : vector<64x16xf32>
    %88 = tpu.matmul %87, %7, %cst_36 {dimension_numbers = #tpu.dot_dimension_numbers<[1], [0], [0], [1], [0, 0, 1, 1], [], []>} : vector<64x16xf32>, vector<16x16xf32>, vector<64x16xf32> -> vector<64x16xf32>
    %cst_37 = arith.constant dense<0.000000e+00> : vector<64xf32>
    %89 = vector.multi_reduction <add>, %87, %cst_37 [1] : vector<64x16xf32> to vector<64xf32>
    %90 = vector.shape_cast %89 : vector<64xf32> to vector<64x1xf32>
    %91 = tpu.reciprocal %90 {approx = true} : vector<64x1xf32> -> vector<64x1xf32>
    %92 = vector.broadcast %91 : vector<64x1xf32> to vector<64x16xf32>
    %93 = arith.mulf %88, %92 : vector<64x16xf32>
    %c0_38 = arith.constant 0 : index
    %c0_39 = arith.constant 0 : index
    %94 = vector.load %arg1[%c0_38, %c0_39] : memref<64x16xf32, #tpu.memory_space<vmem>>, vector<64x16xf32>
    %c0_40 = arith.constant 0 : index
    %c0_41 = arith.constant 0 : index
    %95 = vector.load %arg7[%c0_40, %c0_41] : memref<16x16xf32, #tpu.memory_space<vmem>>, vector<16x16xf32>
    %cst_42 = arith.constant dense<0.000000e+00> : vector<64x16xf32>
    %96 = tpu.matmul %94, %95, %cst_42 {dimension_numbers = #tpu.dot_dimension_numbers<[1], [0], [0], [1], [0, 0, 1, 1], [], []>} : vector<64x16xf32>, vector<16x16xf32>, vector<64x16xf32> -> vector<64x16xf32>
    %c0_43 = arith.constant 0 : index
    %c0_44 = arith.constant 0 : index
    %97 = vector.load %arg8[%c0_43, %c0_44] : memref<1x16xf32, #tpu.memory_space<vmem>>, vector<1x16xf32>
    %98 = vector.broadcast %97 : vector<1x16xf32> to vector<64x16xf32>
    %99 = arith.addf %96, %98 : vector<64x16xf32>
    %cst_45 = arith.constant 0.000000e+00 : f32
    %100 = vector.broadcast %cst_45 : f32 to vector<64x16xf32>
    %101 = arith.maximumf %99, %100 : vector<64x16xf32>
    %102 = arith.addf %101, %93 : vector<64x16xf32>
    %c0_46 = arith.constant 0 : index
    %c0_47 = arith.constant 0 : index
    %103 = vector.load %arg9[%c0_46, %c0_47] : memref<64x16xf32, #tpu.memory_space<vmem>>, vector<64x16xf32>
    tpu.vector_store %arg9[%c0_46, %c0_47], %102 {strides = array<i32>} : memref<64x16xf32, #tpu.memory_space<vmem>>, vector<64x16xf32>,
    return
  }
  func.func @transform_0(%arg0: i32) -> (i32, i32) {
    %c0_i32 = arith.constant 0 : i32
    %c0_i32_0 = arith.constant 0 : i32
    return %arg0, %c0_i32 : i32, i32
  }
  func.func @transform_1(%arg0: i32) -> (i32, i32) {
    %c0_i32 = arith.constant 0 : i32
    %c0_i32_0 = arith.constant 0 : i32
    return %arg0, %c0_i32 : i32, i32
  }
  func.func @transform_2(%arg0: i32) -> (i32, i32) {
    %c0_i32 = arith.constant 0 : i32
    %c0_i32_0 = arith.constant 0 : i32
    %c0_i32_1 = arith.constant 0 : i32
    return %c0_i32, %c0_i32_0 : i32, i32
  }
  func.func @transform_3(%arg0: i32) -> (i32, i32) {
    %c0_i32 = arith.constant 0 : i32
    %c0_i32_0 = arith.constant 0 : i32
    %c0_i32_1 = arith.constant 0 : i32
    return %c0_i32, %c0_i32_0 : i32, i32
  }
  func.func @transform_4(%arg0: i32) -> (i32, i32) {
    %c0_i32 = arith.constant 0 : i32
    %c0_i32_0 = arith.constant 0 : i32
    %c0_i32_1 = arith.constant 0 : i32
    return %c0_i32, %c0_i32_0 : i32, i32
  }
  func.func @transform_5(%arg0: i32) -> (i32, i32) {
    %c0_i32 = arith.constant 0 : i32
    %c0_i32_0 = arith.constant 0 : i32
    %c0_i32_1 = arith.constant 0 : i32
    return %c0_i32, %c0_i32_0 : i32, i32
  }
  func.func @transform_6(%arg0: i32) -> (i32, i32) {
    %c0_i32 = arith.constant 0 : i32
    %c0_i32_0 = arith.constant 0 : i32
    %c0_i32_1 = arith.constant 0 : i32
    return %c0_i32, %c0_i32_0 : i32, i32
  }
  func.func @transform_7(%arg0: i32) -> (i32, i32) {
    %c0_i32 = arith.constant 0 : i32
    %c0_i32_0 = arith.constant 0 : i32
    %c0_i32_1 = arith.constant 0 : i32
    return %c0_i32, %c0_i32_0 : i32, i32
  }
  func.func @transform_8(%arg0: i32) -> (i32, i32) {
    %c0_i32 = arith.constant 0 : i32
    %c0_i32_0 = arith.constant 0 : i32
    return %arg0, %c0_i32 : i32, i32
  }
}

</mosaic_0001>

<llo_original>
// kernel: tpu_custom_call.1
$region0: #{tpu_custom_call.1}
  #allocation0 [shape = 'u32[]', space=smem, size = 0x4, offset = 0x4, fixed_abs, tag = 'smem constant byte address 0x4 - core index']
  #allocation1 [shape = 'u32[144,128]{1,0:T(1,128)}', space=vmem, size = 0x12000, scoped, tag = 'internal scratch']
  %s0 = inlined_call_operand.vmem [shape: f32[64,16], index: 0, kind: input, shape index: {}]
  %s1 = inlined_call_operand.vmem [shape: f32[64,3], index: 1, kind: input, shape index: {}]
  %s2 = inlined_call_operand.vmem [shape: f32[16,32], index: 2, kind: input, shape index: {}]
  %s3 = inlined_call_operand.vmem [shape: f32[16,3], index: 3, kind: input, shape index: {}]
  %s4 = inlined_call_operand.vmem [shape: f32[32,16], index: 4, kind: input, shape index: {}]
  %s5 = inlined_call_operand.vmem [shape: f32[1,16], index: 5, kind: input, shape index: {}]
  %s6 = inlined_call_operand.vmem [shape: f32[16,16], index: 6, kind: input, shape index: {}]
  %s7 = inlined_call_operand.vmem [shape: f32[1,16], index: 7, kind: input, shape index: {}]
  %s8 = inlined_call_operand.vmem [shape: f32[64,16], index: 8, kind: output, shape index: {}]
  %s9 = sld [smem:[#allocation0]]
  $region42: #{tpu_custom_call.1} parent=0
    _
  %s11 = ssub.s32 1, %s9
  %s12 = scalar_select 0, %s11, %s9
  // Predicated region
  $region2: #{tpu_custom_call.1} parent=0 // pred_check
    _
  $region3: #{tpu_custom_call.1} parent=0 // pred_check_branch
    %14 = sbr.rel (0) target = $region5
  $region4: #{tpu_custom_call.1} parent=0 // pred_region
    _
  $region5: #{tpu_custom_call.1} parent=0 // pred_fallthru
    _
  // Predicated region
  $region6: #{tpu_custom_call.1} parent=0 // pred_check
    _
  $region7: #{tpu_custom_call.1} parent=0 // pred_check_branch
    %16 = sbr.rel (0) target = $region9
  $region8: #{tpu_custom_call.1} parent=0 // pred_region
    _
  $region9: #{tpu_custom_call.1} parent=0 // pred_fallthru
    _
  // Predicated region
  $region10: #{tpu_custom_call.1} parent=0 // pred_check
    _
  $region11: #{tpu_custom_call.1} parent=0 // pred_check_branch
    %18 = sbr.rel (0) target = $region13
  $region12: #{tpu_custom_call.1} parent=0 // pred_region
    _
  $region13: #{tpu_custom_call.1} parent=0 // pred_fallthru
    _
  // Predicated region
  $region14: #{tpu_custom_call.1} parent=0 // pred_check
    _
  $region15: #{tpu_custom_call.1} parent=0 // pred_check_branch
    %20 = sbr.rel (0) target = $region17
  $region16: #{tpu_custom_call.1} parent=0 // pred_region
    _
  $region17: #{tpu_custom_call.1} parent=0 // pred_fallthru
    _
  // Predicated region
  $region18: #{tpu_custom_call.1} parent=0 // pred_check
    _
  $region19: #{tpu_custom_call.1} parent=0 // pred_check_branch
    %22 = sbr.rel (0) target = $region21
  $region20: #{tpu_custom_call.1} parent=0 // pred_region
    _
  $region21: #{tpu_custom_call.1} parent=0 // pred_fallthru
    _
  // Predicated region
  $region22: #{tpu_custom_call.1} parent=0 // pred_check
    _
  $region23: #{tpu_custom_call.1} parent=0 // pred_check_branch
    %24 = sbr.rel (0) target = $region25
  $region24: #{tpu_custom_call.1} parent=0 // pred_region
    _
  $region25: #{tpu_custom_call.1} parent=0 // pred_fallthru
    _
  // Predicated region
  $region26: #{tpu_custom_call.1} parent=0 // pred_check
    _
  $region27: #{tpu_custom_call.1} parent=0 // pred_check_branch
    %26 = sbr.rel (0) target = $region29
  $region28: #{tpu_custom_call.1} parent=0 // pred_region
    _
  $region29: #{tpu_custom_call.1} parent=0 // pred_fallthru
    _
  // Predicated region
  $region30: #{tpu_custom_call.1} parent=0 // pred_check
    _
  $region31: #{tpu_custom_call.1} parent=0 // pred_check_branch
    %28 = sbr.rel (0) target = $region33
  $region32: #{tpu_custom_call.1} parent=0 // pred_region
    _
  $region33: #{tpu_custom_call.1} parent=0 // pred_fallthru
    _
  %v29 = vld [vmem:[%s2] sm:$0xff]
  %v30 = vld [vmem:[%s2 + $0x8] sm:$0xff]
  %v31 = vld [vmem:[%s4] sm:$0xff]
  %v32 = vld [vmem:[%s4 + $0x8] sm:$0xff]
  %v33 = vld [vmem:[%s4 + $0x10] sm:$0xff]
  %v34 = vld [vmem:[%s4 + $0x18] sm:$0xff]
  %v35 = vld [vmem:[%s5] sm:$0x1]
  %v37 = vlaneseq
  %v38 = vshrl.u32 %v37, 7
  %v39 = vsub.s32 0, %v38
  %v40 = vrot.slane %v35, %v39
  %vm42 = vcmask 261120
  %v44 = vsel %vm42, %v29, 0
  %v47 = vsel %vm42, %v30, 0
  %49 = vmatprep.subr.mxu0 0.0
  %50 = vmatpush1.msra.mxu0 0.0
  %51 = vmatprep.subr.mxu0 0.0
  %52 = vmatpush1.msra.mxu0 0.0
  %53 = vmatprep.subr.mxu0 0.0
  %54 = vmatpush1.msra.mxu0 0.0
  %55 = vmatprep.subr.mxu0 0.0
  %56 = vmatpush1.msra.mxu0 0.0
  %57 = vmatprep.subr.mxu0 0.0
  %58 = vmatpush1.msra.mxu0 0.0
  %59 = vmatprep.subr.mxu0 0.0
  %60 = vmatpush1.msra.mxu0 0.0
  %61 = vmatprep.subr.mxu0 0.0
  %62 = vmatpush1.msra.mxu0 0.0
  %63 = vmatprep.subr.mxu0 0.0
  %64 = vmatpush1.msra.mxu0 0.0
  %65 = vmatprep.subr.mxu0 0.0
  %66 = vmatpush1.msra.mxu0 0.0
  %67 = vmatprep.subr.mxu0 0.0
  %68 = vmatpush1.msra.mxu0 0.0
  %69 = vmatprep.subr.mxu0 0.0
  %70 = vmatpush1.msra.mxu0 0.0
  %71 = vmatprep.subr.mxu0 0.0
  %72 = vmatpush1.msra.mxu0 0.0
  %73 = vmatprep.subr.mxu0 0.0
  %74 = vmatpush1.msra.mxu0 %v34
  %75 = vmatprep.subr.mxu0 0.0
  %76 = vmatpush1.msra.mxu0 %v33
  %77 = vmatprep.subr.mxu0 0.0
  %78 = vmatpush1.msra.mxu0 %v32
  %79 = vmatprep.subr.mxu0 0.0
  %80 = vmatpush1.msra.mxu0 %v31
  %81 = vmatprep.subr.mxu0 0.0
  %82 = vmatpush2.msra.mxu0 0.0
  %83 = vmatprep.subr.mxu0 0.0
  %84 = vmatpush2.msra.mxu0 0.0
  %85 = vmatprep.subr.mxu0 0.0
  %86 = vmatpush2.msra.mxu0 0.0
  %87 = vmatprep.subr.mxu0 0.0
  %88 = vmatpush2.msra.mxu0 0.0
  %89 = vmatprep.subr.mxu0 0.0
  %90 = vmatpush2.msra.mxu0 0.0
  %91 = vmatprep.subr.mxu0 0.0
  %92 = vmatpush2.msra.mxu0 0.0
  %93 = vmatprep.subr.mxu0 0.0
  %94 = vmatpush2.msra.mxu0 0.0
  %95 = vmatprep.subr.mxu0 0.0
  %96 = vmatpush2.msra.mxu0 0.0
  %97 = vmatprep.subr.mxu0 0.0
  %98 = vmatpush2.msra.mxu0 0.0
  %99 = vmatprep.subr.mxu0 0.0
  %100 = vmatpush2.msra.mxu0 0.0
  %101 = vmatprep.subr.mxu0 0.0
  %102 = vmatpush2.msra.mxu0 0.0
  %103 = vmatprep.subr.mxu0 0.0
  %104 = vmatpush2.msra.mxu0 0.0
  %105 = vmatprep.subr.mxu0 0.0
  %106 = vmatpush2.msra.mxu0 0.0
  %107 = vmatprep.subr.mxu0 0.0
  %108 = vmatpush2.msra.mxu0 0.0
  %109 = vmatprep.subr.mxu0 0.0
  %110 = vmatpush2.msra.mxu0 0.0
  %111 = vmatprep.subr.mxu0 0.0
  %112 = vmatpush2.msra.mxu0 0.0
  %113 = vmatprep.mubr.f32.mxu0 0.0
  %114 = vmatmul.mubr.f32.gmra.mxu0 %v44
  %v115 = vpop.f32.mrf.mxu0
  %v116 = vadd.f32 %v40, %v115
  %v117 = vpop.f32.mrf.mxu0
  %118 = vmatprep.mubr.f32.mxu0 0.0
  %119 = vmatmul.mubr.f32.gmra.mxu0 %v47
  %v120 = vpop.f32.mrf.mxu0
  %v121 = vadd.f32 %v40, %v120
  %v122 = vpop.f32.mrf.mxu0
  %123 = vdwg.mxu0
  %v124 = vmax.f32 %v116, 0.0
  %v125 = vmax.f32 %v121, 0.0
  %v126 = vld [vmem:[%s1] sm:$0xff]
  %v127 = vld [vmem:[%s1 + $0x8] sm:$0xff]
  %v128 = vld [vmem:[%s1 + $0x10] sm:$0xff]
  %v129 = vld [vmem:[%s1 + $0x18] sm:$0xff]
  %v130 = vld [vmem:[%s1 + $0x20] sm:$0xff]
  %v131 = vld [vmem:[%s1 + $0x28] sm:$0xff]
  %v132 = vld [vmem:[%s1 + $0x30] sm:$0xff]
  %v133 = vld [vmem:[%s1 + $0x38] sm:$0xff]
  %v134 = vld [vmem:[%s3] sm:$0xff]
  %v135 = vld [vmem:[%s3 + $0x8] sm:$0xff]
  %vm136 = vcmask 23552
  %v138 = vsel %vm136, %v126, 0
  %v141 = vsel %vm136, %v127, 0
  %v144 = vsel %vm136, %v128, 0
  %v147 = vsel %vm136, %v129, 0
  %v150 = vsel %vm136, %v130, 0
  %v153 = vsel %vm136, %v131, 0
  %v156 = vsel %vm136, %v132, 0
  %v159 = vsel %vm136, %v133, 0
  %v162 = vsel %vm136, %v134, 0
  %v165 = vsel %vm136, %v135, 0
  %167 = vmatprep.subr.mxu0 0.0
  %168 = vmatpush1.xpose.msra.mxu0 0.0
  %169 = vmatprep.subr.mxu0 0.0
  %170 = vmatpush1.xpose.msra.mxu0 0.0
  %171 = vmatprep.subr.mxu0 0.0
  %172 = vmatpush1.xpose.msra.mxu0 0.0
  %173 = vmatprep.subr.mxu0 0.0
  %174 = vmatpush1.xpose.msra.mxu0 0.0
  %175 = vmatprep.subr.mxu0 0.0
  %176 = vmatpush1.xpose.msra.mxu0 0.0
  %177 = vmatprep.subr.mxu0 0.0
  %178 = vmatpush1.xpose.msra.mxu0 0.0
  %179 = vmatprep.subr.mxu0 0.0
  %180 = vmatpush1.xpose.msra.mxu0 0.0
  %181 = vmatprep.subr.mxu0 0.0
  %182 = vmatpush1.xpose.msra.mxu0 0.0
  %183 = vmatprep.subr.mxu0 0.0
  %184 = vmatpush1.xpose.msra.mxu0 0.0
  %185 = vmatprep.subr.mxu0 0.0
  %186 = vmatpush1.xpose.msra.mxu0 0.0
  %187 = vmatprep.subr.mxu0 0.0
  %188 = vmatpush1.xpose.msra.mxu0 0.0
  %189 = vmatprep.subr.mxu0 0.0
  %190 = vmatpush1.xpose.msra.mxu0 0.0
  %191 = vmatprep.subr.mxu0 0.0
  %192 = vmatpush1.xpose.msra.mxu0 0.0
  %193 = vmatprep.subr.mxu0 0.0
  %194 = vmatpush1.xpose.msra.mxu0 0.0
  %195 = vmatprep.subr.mxu0 0.0
  %196 = vmatpush1.xpose.msra.mxu0 %v165
  %197 = vmatprep.subr.mxu0 0.0
  %198 = vmatpush1.xpose.msra.mxu0 %v162
  %199 = vmatprep.subr.mxu0 0.0
  %200 = vmatpush2.xpose.msra.mxu0 0.0
  %201 = vmatprep.subr.mxu0 0.0
  %202 = vmatpush2.xpose.msra.mxu0 0.0
  %203 = vmatprep.subr.mxu0 0.0
  %204 = vmatpush2.xpose.msra.mxu0 0.0
  %205 = vmatprep.subr.mxu0 0.0
  %206 = vmatpush2.xpose.msra.mxu0 0.0
  %207 = vmatprep.subr.mxu0 0.0
  %208 = vmatpush2.xpose.msra.mxu0 0.0
  %209 = vmatprep.subr.mxu0 0.0
  %210 = vmatpush2.xpose.msra.mxu0 0.0
  %211 = vmatprep.subr.mxu0 0.0
  %212 = vmatpush2.xpose.msra.mxu0 0.0
  %213 = vmatprep.subr.mxu0 0.0
  %214 = vmatpush2.xpose.msra.mxu0 0.0
  %215 = vmatprep.subr.mxu0 0.0
  %216 = vmatpush2.xpose.msra.mxu0 0.0
  %217 = vmatprep.subr.mxu0 0.0
  %218 = vmatpush2.xpose.msra.mxu0 0.0
  %219 = vmatprep.subr.mxu0 0.0
  %220 = vmatpush2.xpose.msra.mxu0 0.0
  %221 = vmatprep.subr.mxu0 0.0
  %222 = vmatpush2.xpose.msra.mxu0 0.0
  %223 = vmatprep.subr.mxu0 0.0
  %224 = vmatpush2.xpose.msra.mxu0 0.0
  %225 = vmatprep.subr.mxu0 0.0
  %226 = vmatpush2.xpose.msra.mxu0 0.0
  %227 = vmatprep.subr.mxu0 0.0
  %228 = vmatpush2.xpose.msra.mxu0 0.0
  %229 = vmatprep.subr.mxu0 0.0
  %230 = vmatpush2.xpose.msra.mxu0 0.0
  %231 = vmatprep.mubr.f32.mxu0 0.0
  %232 = vmatmul.mubr.f32.gmra.mxu0 %v138
  %v233 = vpop.f32.mrf.mxu0
  %v234 = vadd.f32 0.0, %v233
  %v235 = vpop.f32.mrf.mxu0
  %236 = vmatprep.mubr.f32.mxu0 0.0
  %237 = vmatmul.mubr.f32.gmra.mxu0 %v141
  %v238 = vpop.f32.mrf.mxu0
  %v239 = vadd.f32 0.0, %v238
  %v240 = vpop.f32.mrf.mxu0
  %241 = vmatprep.mubr.f32.mxu0 0.0
  %242 = vmatmul.mubr.f32.gmra.mxu0 %v144
  %v243 = vpop.f32.mrf.mxu0
  %v244 = vadd.f32 0.0, %v243
  %v245 = vpop.f32.mrf.mxu0
  %246 = vmatprep.mubr.f32.mxu0 0.0
  %247 = vmatmul.mubr.f32.gmra.mxu0 %v147
  %v248 = vpop.f32.mrf.mxu0
  %v249 = vadd.f32 0.0, %v248
  %v250 = vpop.f32.mrf.mxu0
  %251 = vmatprep.mubr.f32.mxu0 0.0
  %252 = vmatmul.mubr.f32.gmra.mxu0 %v150
  %v253 = vpop.f32.mrf.mxu0
  %v254 = vadd.f32 0.0, %v253
  %v255 = vpop.f32.mrf.mxu0
  %256 = vmatprep.mubr.f32.mxu0 0.0
  %257 = vmatmul.mubr.f32.gmra.mxu0 %v153
  %v258 = vpop.f32.mrf.mxu0
  %v259 = vadd.f32 0.0, %v258
  %v260 = vpop.f32.mrf.mxu0
  %261 = vmatprep.mubr.f32.mxu0 0.0
  %262 = vmatmul.mubr.f32.gmra.mxu0 %v156
  %v263 = vpop.f32.mrf.mxu0
  %v264 = vadd.f32 0.0, %v263
  %v265 = vpop.f32.mrf.mxu0
  %266 = vmatprep.mubr.f32.mxu0 0.0
  %267 = vmatmul.mubr.f32.gmra.mxu0 %v159
  %v268 = vpop.f32.mrf.mxu0
  %v269 = vadd.f32 0.0, %v268
  %v270 = vpop.f32.mrf.mxu0
  %271 = vdwg.mxu0
  %v272 = vmul.f32 %v126, %v126
  %v273 = vmul.f32 %v127, %v127
  %v274 = vmul.f32 %v128, %v128
  %v275 = vmul.f32 %v129, %v129
  %v276 = vmul.f32 %v130, %v130
  %v277 = vmul.f32 %v131, %v131
  %v278 = vmul.f32 %v132, %v132
  %v279 = vmul.f32 %v133, %v133
  %v280 = vsel %vm136, %v272, 0.0
  %281 = vadd.xlane.f32.xlu0 %v280
  %v282 = vpop.xlane.xlu0 %281
  %v283 = vsel %vm136, %v273, 0.0
  %284 = vadd.xlane.f32.xlu0 %v283
  %v285 = vpop.xlane.xlu0 %284
  %v286 = vsel %vm136, %v274, 0.0
  %287 = vadd.xlane.f32.xlu0 %v286
  %v288 = vpop.xlane.xlu0 %287
  %v289 = vsel %vm136, %v275, 0.0
  %290 = vadd.xlane.f32.xlu0 %v289
  %v291 = vpop.xlane.xlu0 %290
  %v292 = vsel %vm136, %v276, 0.0
  %293 = vadd.xlane.f32.xlu0 %v292
  %v294 = vpop.xlane.xlu0 %293
  %v295 = vsel %vm136, %v277, 0.0
  %296 = vadd.xlane.f32.xlu0 %v295
  %v297 = vpop.xlane.xlu0 %296
  %v298 = vsel %vm136, %v278, 0.0
  %299 = vadd.xlane.f32.xlu0 %v298
  %v300 = vpop.xlane.xlu0 %299
  %v301 = vsel %vm136, %v279, 0.0
  %302 = vadd.xlane.f32.xlu0 %v301
  %v303 = vpop.xlane.xlu0 %302
  %v304 = vmul.f32 %v134, %v134
  %v305 = vmul.f32 %v135, %v135
  %v307 = vsel %vm136, 1.0, 0
  %v310 = vsel %vm136, %v304, 0
  %v313 = vsel %vm136, %v305, 0
  %315 = vmatprep.subr.mxu0 0.0
  %316 = vmatpush1.xpose.msra.mxu0 0.0
  %317 = vmatprep.subr.mxu0 0.0
  %318 = vmatpush1.xpose.msra.mxu0 0.0
  %319 = vmatprep.subr.mxu0 0.0
  %320 = vmatpush1.xpose.msra.mxu0 0.0
  %321 = vmatprep.subr.mxu0 0.0
  %322 = vmatpush1.xpose.msra.mxu0 0.0
  %323 = vmatprep.subr.mxu0 0.0
  %324 = vmatpush1.xpose.msra.mxu0 0.0
  %325 = vmatprep.subr.mxu0 0.0
  %326 = vmatpush1.xpose.msra.mxu0 0.0
  %327 = vmatprep.subr.mxu0 0.0
  %328 = vmatpush1.xpose.msra.mxu0 0.0
  %329 = vmatprep.subr.mxu0 0.0
  %330 = vmatpush1.xpose.msra.mxu0 0.0
  %331 = vmatprep.subr.mxu0 0.0
  %332 = vmatpush1.xpose.msra.mxu0 0.0
  %333 = vmatprep.subr.mxu0 0.0
  %334 = vmatpush1.xpose.msra.mxu0 0.0
  %335 = vmatprep.subr.mxu0 0.0
  %336 = vmatpush1.xpose.msra.mxu0 0.0
  %337 = vmatprep.subr.mxu0 0.0
  %338 = vmatpush1.xpose.msra.mxu0 0.0
  %339 = vmatprep.subr.mxu0 0.0
  %340 = vmatpush1.xpose.msra.mxu0 0.0
  %341 = vmatprep.subr.mxu0 0.0
  %342 = vmatpush1.xpose.msra.mxu0 0.0
  %343 = vmatprep.subr.mxu0 0.0
  %344 = vmatpush1.xpose.msra.mxu0 %v313
  %345 = vmatprep.subr.mxu0 0.0
  %346 = vmatpush1.xpose.msra.mxu0 %v310
  %347 = vmatprep.subr.mxu0 0.0
  %348 = vmatpush2.xpose.msra.mxu0 0.0
  %349 = vmatprep.subr.mxu0 0.0
  %350 = vmatpush2.xpose.msra.mxu0 0.0
  %351 = vmatprep.subr.mxu0 0.0
  %352 = vmatpush2.xpose.msra.mxu0 0.0
  %353 = vmatprep.subr.mxu0 0.0
  %354 = vmatpush2.xpose.msra.mxu0 0.0
  %355 = vmatprep.subr.mxu0 0.0
  %356 = vmatpush2.xpose.msra.mxu0 0.0
  %357 = vmatprep.subr.mxu0 0.0
  %358 = vmatpush2.xpose.msra.mxu0 0.0
  %359 = vmatprep.subr.mxu0 0.0
  %360 = vmatpush2.xpose.msra.mxu0 0.0
  %361 = vmatprep.subr.mxu0 0.0
  %362 = vmatpush2.xpose.msra.mxu0 0.0
  %363 = vmatprep.subr.mxu0 0.0
  %364 = vmatpush2.xpose.msra.mxu0 0.0
  %365 = vmatprep.subr.mxu0 0.0
  %366 = vmatpush2.xpose.msra.mxu0 0.0
  %367 = vmatprep.subr.mxu0 0.0
  %368 = vmatpush2.xpose.msra.mxu0 0.0
  %369 = vmatprep.subr.mxu0 0.0
  %370 = vmatpush2.xpose.msra.mxu0 0.0
  %371 = vmatprep.subr.mxu0 0.0
  %372 = vmatpush2.xpose.msra.mxu0 0.0
  %373 = vmatprep.subr.mxu0 0.0
  %374 = vmatpush2.xpose.msra.mxu0 0.0
  %375 = vmatprep.subr.mxu0 0.0
  %376 = vmatpush2.xpose.msra.mxu0 0.0
  %377 = vmatprep.subr.mxu0 0.0
  %378 = vmatpush2.xpose.msra.mxu0 0.0
  %379 = vmatprep.mubr.f32.mxu0 0.0
  %380 = vmatmul.mubr.f32.gmra.mxu0 %v307
  %v381 = vpop.f32.mrf.mxu0
  %v382 = vadd.f32 0.0, %v381
  %v383 = vpop.f32.mrf.mxu0
  %384 = vdwg.mxu0
  %v385 = vlaneseq
  %v386 = vshrl.u32 %v385, 7
  %v387 = vsub.s32 0, %v386
  %v388 = vrot.slane %v382, %v387
  %v389 = vadd.f32 %v282, %v388
  %v390 = vadd.f32 %v285, %v388
  %v391 = vadd.f32 %v288, %v388
  %v392 = vadd.f32 %v291, %v388
  %v393 = vadd.f32 %v294, %v388
  %v394 = vadd.f32 %v297, %v388
  %v395 = vadd.f32 %v300, %v388
  %v396 = vadd.f32 %v303, %v388
  %v397 = vmul.f32 %v234, 2.0
  %v398 = vmul.f32 %v239, 2.0
  %v399 = vmul.f32 %v244, 2.0
  %v400 = vmul.f32 %v249, 2.0
  %v401 = vmul.f32 %v254, 2.0
  %v402 = vmul.f32 %v259, 2.0
  %v403 = vmul.f32 %v264, 2.0
  %v404 = vmul.f32 %v269, 2.0
  %v405 = vsub.f32 %v389, %v397
  %v406 = vsub.f32 %v390, %v398
  %v407 = vsub.f32 %v391, %v399
  %v408 = vsub.f32 %v392, %v400
  %v409 = vsub.f32 %v393, %v401
  %v410 = vsub.f32 %v394, %v402
  %v411 = vsub.f32 %v395, %v403
  %v412 = vsub.f32 %v396, %v404
  %v413 = vmax.f32 %v405, 0.0
  %v414 = vmax.f32 %v406, 0.0
  %v415 = vmax.f32 %v407, 0.0
  %v416 = vmax.f32 %v408, 0.0
  %v417 = vmax.f32 %v409, 0.0
  %v418 = vmax.f32 %v410, 0.0
  %v419 = vmax.f32 %v411, 0.0
  %v420 = vmax.f32 %v412, 0.0
  %v421 = vlaneseq
  %v422 = vand.u32 %v421, 127
  %vm423 = vcmask 130048
  %v424 = vsel %vm423, %v413, inf
  %425 = vmin.xlane.f32.xlu0 %v424
  %v426 = vpop.xlane.xlu0 %425
  %v427 = vsel %vm423, %v414, inf
  %428 = vmin.xlane.f32.xlu0 %v427
  %v429 = vpop.xlane.xlu0 %428
  %v430 = vsel %vm423, %v415, inf
  %431 = vmin.xlane.f32.xlu0 %v430
  %v432 = vpop.xlane.xlu0 %431
  %v433 = vsel %vm423, %v416, inf
  %434 = vmin.xlane.f32.xlu0 %v433
  %v435 = vpop.xlane.xlu0 %434
  %v436 = vsel %vm423, %v417, inf
  %437 = vmin.xlane.f32.xlu0 %v436
  %v438 = vpop.xlane.xlu0 %437
  %v439 = vsel %vm423, %v418, inf
  %440 = vmin.xlane.f32.xlu0 %v439
  %v441 = vpop.xlane.xlu0 %440
  %v442 = vsel %vm423, %v419, inf
  %443 = vmin.xlane.f32.xlu0 %v442
  %v444 = vpop.xlane.xlu0 %443
  %v445 = vsel %vm423, %v420, inf
  %446 = vmin.xlane.f32.xlu0 %v445
  %v447 = vpop.xlane.xlu0 %446
  %vm448 = vcmp.eq.f32.partialorder %v413, %v426
  %vm449 = vcmp.eq.f32.partialorder %v414, %v429
  %vm450 = vcmp.eq.f32.partialorder %v415, %v432
  %vm451 = vcmp.eq.f32.partialorder %v416, %v435
  %vm452 = vcmp.eq.f32.partialorder %v417, %v438
  %vm453 = vcmp.eq.f32.partialorder %v418, %v441
  %vm454 = vcmp.eq.f32.partialorder %v419, %v444
  %vm455 = vcmp.eq.f32.partialorder %v420, %v447
  %v456 = vsel %vm448, %v422, 16
  %v457 = vsel %vm449, %v422, 16
  %v458 = vsel %vm450, %v422, 16
  %v459 = vsel %vm451, %v422, 16
  %v460 = vsel %vm452, %v422, 16
  %v461 = vsel %vm453, %v422, 16
  %v462 = vsel %vm454, %v422, 16
  %v463 = vsel %vm455, %v422, 16
  %v464 = vsel %vm423, %v456, 2147483647
  %v465 = vand.u32 %v464, 65535
  %v466 = vshra.s32 %v464, 16
  %v467 = vcvt.s32.f32 %v465
  %v468 = vcvt.s32.f32 %v466
  %469 = vmin.xlane.f32.xlu0 %v468
  %v470 = vpop.xlane.xlu0 %469
  %vm471 = vcmp.eq.f32.partialorder %v468, %v470
  %v472 = vsel %vm471, %v467, inf
  %473 = vmin.xlane.f32.xlu0 %v472
  %v474 = vpop.xlane.xlu0 %473
  %v475 = vcvt.f32.s32 %v474
  %v476 = vcvt.f32.s32 %v470
  %v477 = vshll.u32 %v476, 16
  %v478 = vadd.s32 %v477, %v475
  %v479 = vsel %vm423, %v457, 2147483647
  %v480 = vand.u32 %v479, 65535
  %v481 = vshra.s32 %v479, 16
  %v482 = vcvt.s32.f32 %v480
  %v483 = vcvt.s32.f32 %v481
  %484 = vmin.xlane.f32.xlu0 %v483
  %v485 = vpop.xlane.xlu0 %484
  %vm486 = vcmp.eq.f32.partialorder %v483, %v485
  %v487 = vsel %vm486, %v482, inf
  %488 = vmin.xlane.f32.xlu0 %v487
  %v489 = vpop.xlane.xlu0 %488
  %v490 = vcvt.f32.s32 %v489
  %v491 = vcvt.f32.s32 %v485
  %v492 = vshll.u32 %v491, 16
  %v493 = vadd.s32 %v492, %v490
  %v494 = vsel %vm423, %v458, 2147483647
  %v495 = vand.u32 %v494, 65535
  %v496 = vshra.s32 %v494, 16
  %v497 = vcvt.s32.f32 %v495
  %v498 = vcvt.s32.f32 %v496
  %499 = vmin.xlane.f32.xlu0 %v498
  %v500 = vpop.xlane.xlu0 %499
  %vm501 = vcmp.eq.f32.partialorder %v498, %v500
  %v502 = vsel %vm501, %v497, inf
  %503 = vmin.xlane.f32.xlu0 %v502
  %v504 = vpop.xlane.xlu0 %503
  %v505 = vcvt.f32.s32 %v504
  %v506 = vcvt.f32.s32 %v500
  %v507 = vshll.u32 %v506, 16
  %v508 = vadd.s32 %v507, %v505
  %v509 = vsel %vm423, %v459, 2147483647
  %v510 = vand.u32 %v509, 65535
  %v511 = vshra.s32 %v509, 16
  %v512 = vcvt.s32.f32 %v510
  %v513 = vcvt.s32.f32 %v511
  %514 = vmin.xlane.f32.xlu0 %v513
  %v515 = vpop.xlane.xlu0 %514
  %vm516 = vcmp.eq.f32.partialorder %v513, %v515
  %v517 = vsel %vm516, %v512, inf
  %518 = vmin.xlane.f32.xlu0 %v517
  %v519 = vpop.xlane.xlu0 %518
  %v520 = vcvt.f32.s32 %v519
  %v521 = vcvt.f32.s32 %v515
  %v522 = vshll.u32 %v521, 16
  %v523 = vadd.s32 %v522, %v520
  %v524 = vsel %vm423, %v460, 2147483647
  %v525 = vand.u32 %v524, 65535
  %v526 = vshra.s32 %v524, 16
  %v527 = vcvt.s32.f32 %v525
  %v528 = vcvt.s32.f32 %v526
  %529 = vmin.xlane.f32.xlu0 %v528
  %v530 = vpop.xlane.xlu0 %529
  %vm531 = vcmp.eq.f32.partialorder %v528, %v530
  %v532 = vsel %vm531, %v527, inf
  %533 = vmin.xlane.f32.xlu0 %v532
  %v534 = vpop.xlane.xlu0 %533
  %v535 = vcvt.f32.s32 %v534
  %v536 = vcvt.f32.s32 %v530
  %v537 = vshll.u32 %v536, 16
  %v538 = vadd.s32 %v537, %v535
  %v539 = vsel %vm423, %v461, 2147483647
  %v540 = vand.u32 %v539, 65535
  %v541 = vshra.s32 %v539, 16
  %v542 = vcvt.s32.f32 %v540
  %v543 = vcvt.s32.f32 %v541
  %544 = vmin.xlane.f32.xlu0 %v543
  %v545 = vpop.xlane.xlu0 %544
  %vm546 = vcmp.eq.f32.partialorder %v543, %v545
  %v547 = vsel %vm546, %v542, inf
  %548 = vmin.xlane.f32.xlu0 %v547
  %v549 = vpop.xlane.xlu0 %548
  %v550 = vcvt.f32.s32 %v549
  %v551 = vcvt.f32.s32 %v545
  %v552 = vshll.u32 %v551, 16
  %v553 = vadd.s32 %v552, %v550
  %v554 = vsel %vm423, %v462, 2147483647
  %v555 = vand.u32 %v554, 65535
  %v556 = vshra.s32 %v554, 16
  %v557 = vcvt.s32.f32 %v555
  %v558 = vcvt.s32.f32 %v556
  %559 = vmin.xlane.f32.xlu0 %v558
  %v560 = vpop.xlane.xlu0 %559
  %vm561 = vcmp.eq.f32.partialorder %v558, %v560
  %v562 = vsel %vm561, %v557, inf
  %563 = vmin.xlane.f32.xlu0 %v562
  %v564 = vpop.xlane.xlu0 %563
  %v565 = vcvt.f32.s32 %v564
  %v566 = vcvt.f32.s32 %v560
  %v567 = vshll.u32 %v566, 16
  %v568 = vadd.s32 %v567, %v565
  %v569 = vsel %vm423, %v463, 2147483647
  %v570 = vand.u32 %v569, 65535
  %v571 = vshra.s32 %v569, 16
  %v572 = vcvt.s32.f32 %v570
  %v573 = vcvt.s32.f32 %v571
  %574 = vmin.xlane.f32.xlu0 %v573
  %v575 = vpop.xlane.xlu0 %574
  %vm576 = vcmp.eq.f32.partialorder %v573, %v575
  %v577 = vsel %vm576, %v572, inf
  %578 = vmin.xlane.f32.xlu0 %v577
  %v579 = vpop.xlane.xlu0 %578
  %v580 = vcvt.f32.s32 %v579
  %v581 = vcvt.f32.s32 %v575
  %v582 = vshll.u32 %v581, 16
  %v583 = vadd.s32 %v582, %v580
  %vm584 = vcmp.eq.s32.totalorder %v422, %v478
  %vm585 = vcmp.eq.s32.totalorder %v422, %v493
  %vm586 = vcmp.eq.s32.totalorder %v422, %v508
  %vm587 = vcmp.eq.s32.totalorder %v422, %v523
  %vm588 = vcmp.eq.s32.totalorder %v422, %v538
  %vm589 = vcmp.eq.s32.totalorder %v422, %v553
  %vm590 = vcmp.eq.s32.totalorder %v422, %v568
  %vm591 = vcmp.eq.s32.totalorder %v422, %v583
  %v592 = vmax.f32 %v426, 1e-16
  %v593 = vmax.f32 %v429, 1e-16
  %v594 = vmax.f32 %v432, 1e-16
  %v595 = vmax.f32 %v435, 1e-16
  %v596 = vmax.f32 %v438, 1e-16
  %v597 = vmax.f32 %v441, 1e-16
  %v598 = vmax.f32 %v444, 1e-16
  %v599 = vmax.f32 %v447, 1e-16
  %v600 = vrcp.pop %v592
  %v601 = vmul.f32 1.0, %v600
  %v602 = vrcp.pop %v593
  %v603 = vmul.f32 1.0, %v602
  %v604 = vrcp.pop %v594
  %v605 = vmul.f32 1.0, %v604
  %v606 = vrcp.pop %v595
  %v607 = vmul.f32 1.0, %v606
  %v608 = vrcp.pop %v596
  %v609 = vmul.f32 1.0, %v608
  %v610 = vrcp.pop %v597
  %v611 = vmul.f32 1.0, %v610
  %v612 = vrcp.pop %v598
  %v613 = vmul.f32 1.0, %v612
  %v614 = vrcp.pop %v599
  %v615 = vmul.f32 1.0, %v614
  %v616 = vsel %vm584, %v601, 0.0
  %v617 = vsel %vm585, %v603, 0.0
  %v618 = vsel %vm586, %v605, 0.0
  %v619 = vsel %vm587, %v607, 0.0
  %v620 = vsel %vm588, %v609, 0.0
  %v621 = vsel %vm589, %v611, 0.0
  %v622 = vsel %vm590, %v613, 0.0
  %v623 = vsel %vm591, %v615, 0.0
  %v624 = vadd.f32 %v616, 0.0
  %v625 = vadd.f32 %v617, 0.0
  %v626 = vadd.f32 %v618, 0.0
  %v627 = vadd.f32 %v619, 0.0
  %v628 = vadd.f32 %v620, 0.0
  %v629 = vadd.f32 %v621, 0.0
  %v630 = vadd.f32 %v622, 0.0
  %v631 = vadd.f32 %v623, 0.0
  %v632 = vsel %vm584, inf, %v413
  %v633 = vsel %vm585, inf, %v414
  %v634 = vsel %vm586, inf, %v415
  %v635 = vsel %vm587, inf, %v416
  %v636 = vsel %vm588, inf, %v417
  %v637 = vsel %vm589, inf, %v418
  %v638 = vsel %vm590, inf, %v419
  %v639 = vsel %vm591, inf, %v420
  %v640 = vsel %vm423, %v632, inf
  %641 = vmin.xlane.f32.xlu0 %v640
  %v642 = vpop.xlane.xlu0 %641
  %v643 = vsel %vm423, %v633, inf
  %644 = vmin.xlane.f32.xlu0 %v643
  %v645 = vpop.xlane.xlu0 %644
  %v646 = vsel %vm423, %v634, inf
  %647 = vmin.xlane.f32.xlu0 %v646
  %v648 = vpop.xlane.xlu0 %647
  %v649 = vsel %vm423, %v635, inf
  %650 = vmin.xlane.f32.xlu0 %v649
  %v651 = vpop.xlane.xlu0 %650
  %v652 = vsel %vm423, %v636, inf
  %653 = vmin.xlane.f32.xlu0 %v652
  %v654 = vpop.xlane.xlu0 %653
  %v655 = vsel %vm423, %v637, inf
  %656 = vmin.xlane.f32.xlu0 %v655
  %v657 = vpop.xlane.xlu0 %656
  %v658 = vsel %vm423, %v638, inf
  %659 = vmin.xlane.f32.xlu0 %v658
  %v660 = vpop.xlane.xlu0 %659
  %v661 = vsel %vm423, %v639, inf
  %662 = vmin.xlane.f32.xlu0 %v661
  %v663 = vpop.xlane.xlu0 %662
  %vm664 = vcmp.eq.f32.partialorder %v632, %v642
  %vm665 = vcmp.eq.f32.partialorder %v633, %v645
  %vm666 = vcmp.eq.f32.partialorder %v634, %v648
  %vm667 = vcmp.eq.f32.partialorder %v635, %v651
  %vm668 = vcmp.eq.f32.partialorder %v636, %v654
  %vm669 = vcmp.eq.f32.partialorder %v637, %v657
  %vm670 = vcmp.eq.f32.partialorder %v638, %v660
  %vm671 = vcmp.eq.f32.partialorder %v639, %v663
  %v672 = vsel %vm664, %v422, 16
  %v673 = vsel %vm665, %v422, 16
  %v674 = vsel %vm666, %v422, 16
  %v675 = vsel %vm667, %v422, 16
  %v676 = vsel %vm668, %v422, 16
  %v677 = vsel %vm669, %v422, 16
  %v678 = vsel %vm670, %v422, 16
  %v679 = vsel %vm671, %v422, 16
  %v680 = vsel %vm423, %v672, 2147483647
  %v681 = vand.u32 %v680, 65535
  %v682 = vshra.s32 %v680, 16
  %v683 = vcvt.s32.f32 %v681
  %v684 = vcvt.s32.f32 %v682
  %685 = vmin.xlane.f32.xlu0 %v684
  %v686 = vpop.xlane.xlu0 %685
  %vm687 = vcmp.eq.f32.partialorder %v684, %v686
  %v688 = vsel %vm687, %v683, inf
  %689 = vmin.xlane.f32.xlu0 %v688
  %v690 = vpop.xlane.xlu0 %689
  %v691 = vcvt.f32.s32 %v690
  %v692 = vcvt.f32.s32 %v686
  %v693 = vshll.u32 %v692, 16
  %v694 = vadd.s32 %v693, %v691
  %v695 = vsel %vm423, %v673, 2147483647
  %v696 = vand.u32 %v695, 65535
  %v697 = vshra.s32 %v695, 16
  %v698 = vcvt.s32.f32 %v696
  %v699 = vcvt.s32.f32 %v697
  %700 = vmin.xlane.f32.xlu0 %v699
  %v701 = vpop.xlane.xlu0 %700
  %vm702 = vcmp.eq.f32.partialorder %v699, %v701
  %v703 = vsel %vm702, %v698, inf
  %704 = vmin.xlane.f32.xlu0 %v703
  %v705 = vpop.xlane.xlu0 %704
  %v706 = vcvt.f32.s32 %v705
  %v707 = vcvt.f32.s32 %v701
  %v708 = vshll.u32 %v707, 16
  %v709 = vadd.s32 %v708, %v706
  %v710 = vsel %vm423, %v674, 2147483647
  %v711 = vand.u32 %v710, 65535
  %v712 = vshra.s32 %v710, 16
  %v713 = vcvt.s32.f32 %v711
  %v714 = vcvt.s32.f32 %v712
  %715 = vmin.xlane.f32.xlu0 %v714
  %v716 = vpop.xlane.xlu0 %715
  %vm717 = vcmp.eq.f32.partialorder %v714, %v716
  %v718 = vsel %vm717, %v713, inf
  %719 = vmin.xlane.f32.xlu0 %v718
  %v720 = vpop.xlane.xlu0 %719
  %v721 = vcvt.f32.s32 %v720
  %v722 = vcvt.f32.s32 %v716
  %v723 = vshll.u32 %v722, 16
  %v724 = vadd.s32 %v723, %v721
  %v725 = vsel %vm423, %v675, 2147483647
  %v726 = vand.u32 %v725, 65535
  %v727 = vshra.s32 %v725, 16
  %v728 = vcvt.s32.f32 %v726
  %v729 = vcvt.s32.f32 %v727
  %730 = vmin.xlane.f32.xlu0 %v729
  %v731 = vpop.xlane.xlu0 %730
  %vm732 = vcmp.eq.f32.partialorder %v729, %v731
  %v733 = vsel %vm732, %v728, inf
  %734 = vmin.xlane.f32.xlu0 %v733
  %v735 = vpop.xlane.xlu0 %734
  %v736 = vcvt.f32.s32 %v735
  %v737 = vcvt.f32.s32 %v731
  %v738 = vshll.u32 %v737, 16
  %v739 = vadd.s32 %v738, %v736
  %v740 = vsel %vm423, %v676, 2147483647
  %v741 = vand.u32 %v740, 65535
  %v742 = vshra.s32 %v740, 16
  %v743 = vcvt.s32.f32 %v741
  %v744 = vcvt.s32.f32 %v742
  %745 = vmin.xlane.f32.xlu0 %v744
  %v746 = vpop.xlane.xlu0 %745
  %vm747 = vcmp.eq.f32.partialorder %v744, %v746
  %v748 = vsel %vm747, %v743, inf
  %749 = vmin.xlane.f32.xlu0 %v748
  %v750 = vpop.xlane.xlu0 %749
  %v751 = vcvt.f32.s32 %v750
  %v752 = vcvt.f32.s32 %v746
  %v753 = vshll.u32 %v752, 16
  %v754 = vadd.s32 %v753, %v751
  %v755 = vsel %vm423, %v677, 2147483647
  %v756 = vand.u32 %v755, 65535
  %v757 = vshra.s32 %v755, 16
  %v758 = vcvt.s32.f32 %v756
  %v759 = vcvt.s32.f32 %v757
  %760 = vmin.xlane.f32.xlu0 %v759
  %v761 = vpop.xlane.xlu0 %760
  %vm762 = vcmp.eq.f32.partialorder %v759, %v761
  %v763 = vsel %vm762, %v758, inf
  %764 = vmin.xlane.f32.xlu0 %v763
  %v765 = vpop.xlane.xlu0 %764
  %v766 = vcvt.f32.s32 %v765
  %v767 = vcvt.f32.s32 %v761
  %v768 = vshll.u32 %v767, 16
  %v769 = vadd.s32 %v768, %v766
  %v770 = vsel %vm423, %v678, 2147483647
  %v771 = vand.u32 %v770, 65535
  %v772 = vshra.s32 %v770, 16
  %v773 = vcvt.s32.f32 %v771
  %v774 = vcvt.s32.f32 %v772
  %775 = vmin.xlane.f32.xlu0 %v774
  %v776 = vpop.xlane.xlu0 %775
  %vm777 = vcmp.eq.f32.partialorder %v774, %v776
  %v778 = vsel %vm777, %v773, inf
  %779 = vmin.xlane.f32.xlu0 %v778
  %v780 = vpop.xlane.xlu0 %779
  %v781 = vcvt.f32.s32 %v780
  %v782 = vcvt.f32.s32 %v776
  %v783 = vshll.u32 %v782, 16
  %v784 = vadd.s32 %v783, %v781
  %v785 = vsel %vm423, %v679, 2147483647
  %v786 = vand.u32 %v785, 65535
  %v787 = vshra.s32 %v785, 16
  %v788 = vcvt.s32.f32 %v786
  %v789 = vcvt.s32.f32 %v787
  %790 = vmin.xlane.f32.xlu0 %v789
  %v791 = vpop.xlane.xlu0 %790
  %vm792 = vcmp.eq.f32.partialorder %v789, %v791
  %v793 = vsel %vm792, %v788, inf
  %794 = vmin.xlane.f32.xlu0 %v793
  %v795 = vpop.xlane.xlu0 %794
  %v796 = vcvt.f32.s32 %v795
  %v797 = vcvt.f32.s32 %v791
  %v798 = vshll.u32 %v797, 16
  %v799 = vadd.s32 %v798, %v796
  %vm800 = vcmp.eq.s32.totalorder %v422, %v694
  %vm801 = vcmp.eq.s32.totalorder %v422, %v709
  %vm802 = vcmp.eq.s32.totalorder %v422, %v724
  %vm803 = vcmp.eq.s32.totalorder %v422, %v739
  %vm804 = vcmp.eq.s32.totalorder %v422, %v754
  %vm805 = vcmp.eq.s32.totalorder %v422, %v769
  %vm806 = vcmp.eq.s32.totalorder %v422, %v784
  %vm807 = vcmp.eq.s32.totalorder %v422, %v799
  %v808 = vmax.f32 %v642, 1e-16
  %v809 = vmax.f32 %v645, 1e-16
  %v810 = vmax.f32 %v648, 1e-16
  %v811 = vmax.f32 %v651, 1e-16
  %v812 = vmax.f32 %v654, 1e-16
  %v813 = vmax.f32 %v657, 1e-16
  %v814 = vmax.f32 %v660, 1e-16
  %v815 = vmax.f32 %v663, 1e-16
  %v816 = vrcp.pop %v808
  %v817 = vmul.f32 1.0, %v816
  %v818 = vrcp.pop %v809
  %v819 = vmul.f32 1.0, %v818
  %v820 = vrcp.pop %v810
  %v821 = vmul.f32 1.0, %v820
  %v822 = vrcp.pop %v811
  %v823 = vmul.f32 1.0, %v822
  %v824 = vrcp.pop %v812
  %v825 = vmul.f32 1.0, %v824
  %v826 = vrcp.pop %v813
  %v827 = vmul.f32 1.0, %v826
  %v828 = vrcp.pop %v814
  %v829 = vmul.f32 1.0, %v828
  %v830 = vrcp.pop %v815
  %v831 = vmul.f32 1.0, %v830
  %v832 = vsel %vm800, %v817, 0.0
  %v833 = vsel %vm801, %v819, 0.0
  %v834 = vsel %vm802, %v821, 0.0
  %v835 = vsel %vm803, %v823, 0.0
  %v836 = vsel %vm804, %v825, 0.0
  %v837 = vsel %vm805, %v827, 0.0
  %v838 = vsel %vm806, %v829, 0.0
  %v839 = vsel %vm807, %v831, 0.0
  %v840 = vadd.f32 %v624, %v832
  %v841 = vadd.f32 %v625, %v833
  %v842 = vadd.f32 %v626, %v834
  %v843 = vadd.f32 %v627, %v835
  %v844 = vadd.f32 %v628, %v836
  %v845 = vadd.f32 %v629, %v837
  %v846 = vadd.f32 %v630, %v838
  %v847 = vadd.f32 %v631, %v839
  %v848 = vsel %vm800, inf, %v632
  %v849 = vsel %vm801, inf, %v633
  %v850 = vsel %vm802, inf, %v634
  %v851 = vsel %vm803, inf, %v635
  %v852 = vsel %vm804, inf, %v636
  %v853 = vsel %vm805, inf, %v637
  %v854 = vsel %vm806, inf, %v638
  %v855 = vsel %vm807, inf, %v639
  %v856 = vsel %vm423, %v848, inf
  %857 = vmin.xlane.f32.xlu0 %v856
  %v858 = vpop.xlane.xlu0 %857
  %v859 = vsel %vm423, %v849, inf
  %860 = vmin.xlane.f32.xlu0 %v859
  %v861 = vpop.xlane.xlu0 %860
  %v862 = vsel %vm423, %v850, inf
  %863 = vmin.xlane.f32.xlu0 %v862
  %v864 = vpop.xlane.xlu0 %863
  %v865 = vsel %vm423, %v851, inf
  %866 = vmin.xlane.f32.xlu0 %v865
  %v867 = vpop.xlane.xlu0 %866
  %v868 = vsel %vm423, %v852, inf
  %869 = vmin.xlane.f32.xlu0 %v868
  %v870 = vpop.xlane.xlu0 %869
  %v871 = vsel %vm423, %v853, inf
  %872 = vmin.xlane.f32.xlu0 %v871
  %v873 = vpop.xlane.xlu0 %872
  %v874 = vsel %vm423, %v854, inf
  %875 = vmin.xlane.f32.xlu0 %v874
  %v876 = vpop.xlane.xlu0 %875
  %v877 = vsel %vm423, %v855, inf
  %878 = vmin.xlane.f32.xlu0 %v877
  %v879 = vpop.xlane.xlu0 %878
  %vm880 = vcmp.eq.f32.partialorder %v848, %v858
  %vm881 = vcmp.eq.f32.partialorder %v849, %v861
  %vm882 = vcmp.eq.f32.partialorder %v850, %v864
  %vm883 = vcmp.eq.f32.partialorder %v851, %v867
  %vm884 = vcmp.eq.f32.partialorder %v852, %v870
  %vm885 = vcmp.eq.f32.partialorder %v853, %v873
  %vm886 = vcmp.eq.f32.partialorder %v854, %v876
  %vm887 = vcmp.eq.f32.partialorder %v855, %v879
  %v888 = vsel %vm880, %v422, 16
  %v889 = vsel %vm881, %v422, 16
  %v890 = vsel %vm882, %v422, 16
  %v891 = vsel %vm883, %v422, 16
  %v892 = vsel %vm884, %v422, 16
  %v893 = vsel %vm885, %v422, 16
  %v894 = vsel %vm886, %v422, 16
  %v895 = vsel %vm887, %v422, 16
  %v896 = vsel %vm423, %v888, 2147483647
  %v897 = vand.u32 %v896, 65535
  %v898 = vshra.s32 %v896, 16
  %v899 = vcvt.s32.f32 %v897
  %v900 = vcvt.s32.f32 %v898
  %901 = vmin.xlane.f32.xlu0 %v900
  %v902 = vpop.xlane.xlu0 %901
  %vm903 = vcmp.eq.f32.partialorder %v900, %v902
  %v904 = vsel %vm903, %v899, inf
  %905 = vmin.xlane.f32.xlu0 %v904
  %v906 = vpop.xlane.xlu0 %905
  %v907 = vcvt.f32.s32 %v906
  %v908 = vcvt.f32.s32 %v902
  %v909 = vshll.u32 %v908, 16
  %v910 = vadd.s32 %v909, %v907
  %v911 = vsel %vm423, %v889, 2147483647
  %v912 = vand.u32 %v911, 65535
  %v913 = vshra.s32 %v911, 16
  %v914 = vcvt.s32.f32 %v912
  %v915 = vcvt.s32.f32 %v913
  %916 = vmin.xlane.f32.xlu0 %v915
  %v917 = vpop.xlane.xlu0 %916
  %vm918 = vcmp.eq.f32.partialorder %v915, %v917
  %v919 = vsel %vm918, %v914, inf
  %920 = vmin.xlane.f32.xlu0 %v919
  %v921 = vpop.xlane.xlu0 %920
  %v922 = vcvt.f32.s32 %v921
  %v923 = vcvt.f32.s32 %v917
  %v924 = vshll.u32 %v923, 16
  %v925 = vadd.s32 %v924, %v922
  %v926 = vsel %vm423, %v890, 2147483647
  %v927 = vand.u32 %v926, 65535
  %v928 = vshra.s32 %v926, 16
  %v929 = vcvt.s32.f32 %v927
  %v930 = vcvt.s32.f32 %v928
  %931 = vmin.xlane.f32.xlu0 %v930
  %v932 = vpop.xlane.xlu0 %931
  %vm933 = vcmp.eq.f32.partialorder %v930, %v932
  %v934 = vsel %vm933, %v929, inf
  %935 = vmin.xlane.f32.xlu0 %v934
  %v936 = vpop.xlane.xlu0 %935
  %v937 = vcvt.f32.s32 %v936
  %v938 = vcvt.f32.s32 %v932
  %v939 = vshll.u32 %v938, 16
  %v940 = vadd.s32 %v939, %v937
  %v941 = vsel %vm423, %v891, 2147483647
  %v942 = vand.u32 %v941, 65535
  %v943 = vshra.s32 %v941, 16
  %v944 = vcvt.s32.f32 %v942
  %v945 = vcvt.s32.f32 %v943
  %946 = vmin.xlane.f32.xlu0 %v945
  %v947 = vpop.xlane.xlu0 %946
  %vm948 = vcmp.eq.f32.partialorder %v945, %v947
  %v949 = vsel %vm948, %v944, inf
  %950 = vmin.xlane.f32.xlu0 %v949
  %v951 = vpop.xlane.xlu0 %950
  %v952 = vcvt.f32.s32 %v951
  %v953 = vcvt.f32.s32 %v947
  %v954 = vshll.u32 %v953, 16
  %v955 = vadd.s32 %v954, %v952
  %v956 = vsel %vm423, %v892, 2147483647
  %v957 = vand.u32 %v956, 65535
  %v958 = vshra.s32 %v956, 16
  %v959 = vcvt.s32.f32 %v957
  %v960 = vcvt.s32.f32 %v958
  %961 = vmin.xlane.f32.xlu0 %v960
  %v962 = vpop.xlane.xlu0 %961
  %vm963 = vcmp.eq.f32.partialorder %v960, %v962
  %v964 = vsel %vm963, %v959, inf
  %965 = vmin.xlane.f32.xlu0 %v964
  %v966 = vpop.xlane.xlu0 %965
  %v967 = vcvt.f32.s32 %v966
  %v968 = vcvt.f32.s32 %v962
  %v969 = vshll.u32 %v968, 16
  %v970 = vadd.s32 %v969, %v967
  %v971 = vsel %vm423, %v893, 2147483647
  %v972 = vand.u32 %v971, 65535
  %v973 = vshra.s32 %v971, 16
  %v974 = vcvt.s32.f32 %v972
  %v975 = vcvt.s32.f32 %v973
  %976 = vmin.xlane.f32.xlu0 %v975
  %v977 = vpop.xlane.xlu0 %976
  %vm978 = vcmp.eq.f32.partialorder %v975, %v977
  %v979 = vsel %vm978, %v974, inf
  %980 = vmin.xlane.f32.xlu0 %v979
  %v981 = vpop.xlane.xlu0 %980
  %v982 = vcvt.f32.s32 %v981
  %v983 = vcvt.f32.s32 %v977
  %v984 = vshll.u32 %v983, 16
  %v985 = vadd.s32 %v984, %v982
  %v986 = vsel %vm423, %v894, 2147483647
  %v987 = vand.u32 %v986, 65535
  %v988 = vshra.s32 %v986, 16
  %v989 = vcvt.s32.f32 %v987
  %v990 = vcvt.s32.f32 %v988
  %991 = vmin.xlane.f32.xlu0 %v990
  %v992 = vpop.xlane.xlu0 %991
  %vm993 = vcmp.eq.f32.partialorder %v990, %v992
  %v994 = vsel %vm993, %v989, inf
  %995 = vmin.xlane.f32.xlu0 %v994
  %v996 = vpop.xlane.xlu0 %995
  %v997 = vcvt.f32.s32 %v996
  %v998 = vcvt.f32.s32 %v992
  %v999 = vshll.u32 %v998, 16
  %v1000 = vadd.s32 %v999, %v997
  %v1001 = vsel %vm423, %v895, 2147483647
  %v1002 = vand.u32 %v1001, 65535
  %v1003 = vshra.s32 %v1001, 16
  %v1004 = vcvt.s32.f32 %v1002
  %v1005 = vcvt.s32.f32 %v1003
  %1006 = vmin.xlane.f32.xlu0 %v1005
  %v1007 = vpop.xlane.xlu0 %1006
  %vm1008 = vcmp.eq.f32.partialorder %v1005, %v1007
  %v1009 = vsel %vm1008, %v1004, inf
  %1010 = vmin.xlane.f32.xlu0 %v1009
  %v1011 = vpop.xlane.xlu0 %1010
  %v1012 = vcvt.f32.s32 %v1011
  %v1013 = vcvt.f32.s32 %v1007
  %v1014 = vshll.u32 %v1013, 16
  %v1015 = vadd.s32 %v1014, %v1012
  %vm1016 = vcmp.eq.s32.totalorder %v422, %v910
  %vm1017 = vcmp.eq.s32.totalorder %v422, %v925
  %vm1018 = vcmp.eq.s32.totalorder %v422, %v940
  %vm1019 = vcmp.eq.s32.totalorder %v422, %v955
  %vm1020 = vcmp.eq.s32.totalorder %v422, %v970
  %vm1021 = vcmp.eq.s32.totalorder %v422, %v985
  %vm1022 = vcmp.eq.s32.totalorder %v422, %v1000
  %vm1023 = vcmp.eq.s32.totalorder %v422, %v1015
  %v1024 = vmax.f32 %v858, 1e-16
  %v1025 = vmax.f32 %v861, 1e-16
  %v1026 = vmax.f32 %v864, 1e-16
  %v1027 = vmax.f32 %v867, 1e-16
  %v1028 = vmax.f32 %v870, 1e-16
  %v1029 = vmax.f32 %v873, 1e-16
  %v1030 = vmax.f32 %v876, 1e-16
  %v1031 = vmax.f32 %v879, 1e-16
  %v1032 = vrcp.pop %v1024
  %v1033 = vmul.f32 1.0, %v1032
  %v1034 = vrcp.pop %v1025
  %v1035 = vmul.f32 1.0, %v1034
  %v1036 = vrcp.pop %v1026
  %v1037 = vmul.f32 1.0, %v1036
  %v1038 = vrcp.pop %v1027
  %v1039 = vmul.f32 1.0, %v1038
  %v1040 = vrcp.pop %v1028
  %v1041 = vmul.f32 1.0, %v1040
  %v1042 = vrcp.pop %v1029
  %v1043 = vmul.f32 1.0, %v1042
  %v1044 = vrcp.pop %v1030
  %v1045 = vmul.f32 1.0, %v1044
  %v1046 = vrcp.pop %v1031
  %v1047 = vmul.f32 1.0, %v1046
  %v1048 = vsel %vm1016, %v1033, 0.0
  %v1049 = vsel %vm1017, %v1035, 0.0
  %v1050 = vsel %vm1018, %v1037, 0.0
  %v1051 = vsel %vm1019, %v1039, 0.0
  %v1052 = vsel %vm1020, %v1041, 0.0
  %v1053 = vsel %vm1021, %v1043, 0.0
  %v1054 = vsel %vm1022, %v1045, 0.0
  %v1055 = vsel %vm1023, %v1047, 0.0
  %v1056 = vadd.f32 %v840, %v1048
  %v1057 = vadd.f32 %v841, %v1049
  %v1058 = vadd.f32 %v842, %v1050
  %v1059 = vadd.f32 %v843, %v1051
  %v1060 = vadd.f32 %v844, %v1052
  %v1061 = vadd.f32 %v845, %v1053
  %v1062 = vadd.f32 %v846, %v1054
  %v1063 = vadd.f32 %v847, %v1055
  %v1065 = vsel %vm423, %v1056, 0
  %v1068 = vsel %vm423, %v1057, 0
  %v1071 = vsel %vm423, %v1058, 0
  %v1074 = vsel %vm423, %v1059, 0
  %v1077 = vsel %vm423, %v1060, 0
  %v1080 = vsel %vm423, %v1061, 0
  %v1083 = vsel %vm423, %v1062, 0
  %v1086 = vsel %vm423, %v1063, 0
  %1088 = vmatprep.subr.mxu0 0.0
  %1089 = vmatpush1.msra.mxu0 0.0
  %1090 = vmatprep.subr.mxu0 0.0
  %1091 = vmatpush1.msra.mxu0 0.0
  %1092 = vmatprep.subr.mxu0 0.0
  %1093 = vmatpush1.msra.mxu0 0.0
  %1094 = vmatprep.subr.mxu0 0.0
  %1095 = vmatpush1.msra.mxu0 0.0
  %1096 = vmatprep.subr.mxu0 0.0
  %1097 = vmatpush1.msra.mxu0 0.0
  %1098 = vmatprep.subr.mxu0 0.0
  %1099 = vmatpush1.msra.mxu0 0.0
  %1100 = vmatprep.subr.mxu0 0.0
  %1101 = vmatpush1.msra.mxu0 0.0
  %1102 = vmatprep.subr.mxu0 0.0
  %1103 = vmatpush1.msra.mxu0 0.0
  %1104 = vmatprep.subr.mxu0 0.0
  %1105 = vmatpush1.msra.mxu0 0.0
  %1106 = vmatprep.subr.mxu0 0.0
  %1107 = vmatpush1.msra.mxu0 0.0
  %1108 = vmatprep.subr.mxu0 0.0
  %1109 = vmatpush1.msra.mxu0 0.0
  %1110 = vmatprep.subr.mxu0 0.0
  %1111 = vmatpush1.msra.mxu0 0.0
  %1112 = vmatprep.subr.mxu0 0.0
  %1113 = vmatpush1.msra.mxu0 0.0
  %1114 = vmatprep.subr.mxu0 0.0
  %1115 = vmatpush1.msra.mxu0 0.0
  %1116 = vmatprep.subr.mxu0 0.0
  %1117 = vmatpush1.msra.mxu0 %v125
  %1118 = vmatprep.subr.mxu0 0.0
  %1119 = vmatpush1.msra.mxu0 %v124
  %1120 = vmatprep.subr.mxu0 0.0
  %1121 = vmatpush2.msra.mxu0 0.0
  %1122 = vmatprep.subr.mxu0 0.0
  %1123 = vmatpush2.msra.mxu0 0.0
  %1124 = vmatprep.subr.mxu0 0.0
  %1125 = vmatpush2.msra.mxu0 0.0
  %1126 = vmatprep.subr.mxu0 0.0
  %1127 = vmatpush2.msra.mxu0 0.0
  %1128 = vmatprep.subr.mxu0 0.0
  %1129 = vmatpush2.msra.mxu0 0.0
  %1130 = vmatprep.subr.mxu0 0.0
  %1131 = vmatpush2.msra.mxu0 0.0
  %1132 = vmatprep.subr.mxu0 0.0
  %1133 = vmatpush2.msra.mxu0 0.0
  %1134 = vmatprep.subr.mxu0 0.0
  %1135 = vmatpush2.msra.mxu0 0.0
  %1136 = vmatprep.subr.mxu0 0.0
  %1137 = vmatpush2.msra.mxu0 0.0
  %1138 = vmatprep.subr.mxu0 0.0
  %1139 = vmatpush2.msra.mxu0 0.0
  %1140 = vmatprep.subr.mxu0 0.0
  %1141 = vmatpush2.msra.mxu0 0.0
  %1142 = vmatprep.subr.mxu0 0.0
  %1143 = vmatpush2.msra.mxu0 0.0
  %1144 = vmatprep.subr.mxu0 0.0
  %1145 = vmatpush2.msra.mxu0 0.0
  %1146 = vmatprep.subr.mxu0 0.0
  %1147 = vmatpush2.msra.mxu0 0.0
  %1148 = vmatprep.subr.mxu0 0.0
  %1149 = vmatpush2.msra.mxu0 0.0
  %1150 = vmatprep.subr.mxu0 0.0
  %1151 = vmatpush2.msra.mxu0 0.0
  %1152 = vmatprep.mubr.f32.mxu0 0.0
  %1153 = vmatmul.mubr.f32.gmra.mxu0 %v1065
  %v1154 = vpop.f32.mrf.mxu0
  %v1155 = vadd.f32 0.0, %v1154
  %v1156 = vpop.f32.mrf.mxu0
  %1157 = vmatprep.mubr.f32.mxu0 0.0
  %1158 = vmatmul.mubr.f32.gmra.mxu0 %v1068
  %v1159 = vpop.f32.mrf.mxu0
  %v1160 = vadd.f32 0.0, %v1159
  %v1161 = vpop.f32.mrf.mxu0
  %1162 = vmatprep.mubr.f32.mxu0 0.0
  %1163 = vmatmul.mubr.f32.gmra.mxu0 %v1071
  %v1164 = vpop.f32.mrf.mxu0
  %v1165 = vadd.f32 0.0, %v1164
  %v1166 = vpop.f32.mrf.mxu0
  %1167 = vmatprep.mubr.f32.mxu0 0.0
  %1168 = vmatmul.mubr.f32.gmra.mxu0 %v1074
  %v1169 = vpop.f32.mrf.mxu0
  %v1170 = vadd.f32 0.0, %v1169
  %v1171 = vpop.f32.mrf.mxu0
  %1172 = vmatprep.mubr.f32.mxu0 0.0
  %1173 = vmatmul.mubr.f32.gmra.mxu0 %v1077
  %v1174 = vpop.f32.mrf.mxu0
  %v1175 = vadd.f32 0.0, %v1174
  %v1176 = vpop.f32.mrf.mxu0
  %1177 = vmatprep.mubr.f32.mxu0 0.0
  %1178 = vmatmul.mubr.f32.gmra.mxu0 %v1080
  %v1179 = vpop.f32.mrf.mxu0
  %v1180 = vadd.f32 0.0, %v1179
  %v1181 = vpop.f32.mrf.mxu0
  %1182 = vmatprep.mubr.f32.mxu0 0.0
  %1183 = vmatmul.mubr.f32.gmra.mxu0 %v1083
  %v1184 = vpop.f32.mrf.mxu0
  %v1185 = vadd.f32 0.0, %v1184
  %v1186 = vpop.f32.mrf.mxu0
  %1187 = vmatprep.mubr.f32.mxu0 0.0
  %1188 = vmatmul.mubr.f32.gmra.mxu0 %v1086
  %v1189 = vpop.f32.mrf.mxu0
  %v1190 = vadd.f32 0.0, %v1189
  %v1191 = vpop.f32.mrf.mxu0
  %1192 = vdwg.mxu0
  %v1193 = vsel %vm423, %v1056, 0.0
  %1194 = vadd.xlane.f32.xlu0 %v1193
  %v1195 = vpop.xlane.xlu0 %1194
  %v1196 = vsel %vm423, %v1057, 0.0
  %1197 = vadd.xlane.f32.xlu0 %v1196
  %v1198 = vpop.xlane.xlu0 %1197
  %v1199 = vsel %vm423, %v1058, 0.0
  %1200 = vadd.xlane.f32.xlu0 %v1199
  %v1201 = vpop.xlane.xlu0 %1200
  %v1202 = vsel %vm423, %v1059, 0.0
  %1203 = vadd.xlane.f32.xlu0 %v1202
  %v1204 = vpop.xlane.xlu0 %1203
  %v1205 = vsel %vm423, %v1060, 0.0
  %1206 = vadd.xlane.f32.xlu0 %v1205
  %v1207 = vpop.xlane.xlu0 %1206
  %v1208 = vsel %vm423, %v1061, 0.0
  %1209 = vadd.xlane.f32.xlu0 %v1208
  %v1210 = vpop.xlane.xlu0 %1209
  %v1211 = vsel %vm423, %v1062, 0.0
  %1212 = vadd.xlane.f32.xlu0 %v1211
  %v1213 = vpop.xlane.xlu0 %1212
  %v1214 = vsel %vm423, %v1063, 0.0
  %1215 = vadd.xlane.f32.xlu0 %v1214
  %v1216 = vpop.xlane.xlu0 %1215
  %v1217 = vrcp.pop %v1195
  %v1218 = vrcp.pop %v1198
  %v1219 = vrcp.pop %v1201
  %v1220 = vrcp.pop %v1204
  %v1221 = vrcp.pop %v1207
  %v1222 = vrcp.pop %v1210
  %v1223 = vrcp.pop %v1213
  %v1224 = vrcp.pop %v1216
  %v1225 = vmul.f32 %v1155, %v1217
  %v1226 = vmul.f32 %v1160, %v1218
  %v1227 = vmul.f32 %v1165, %v1219
  %v1228 = vmul.f32 %v1170, %v1220
  %v1229 = vmul.f32 %v1175, %v1221
  %v1230 = vmul.f32 %v1180, %v1222
  %v1231 = vmul.f32 %v1185, %v1223
  %v1232 = vmul.f32 %v1190, %v1224
  %v1233 = vld [vmem:[%s0] sm:$0xff]
  %v1234 = vld [vmem:[%s0 + $0x8] sm:$0xff]
  %v1235 = vld [vmem:[%s0 + $0x10] sm:$0xff]
  %v1236 = vld [vmem:[%s0 + $0x18] sm:$0xff]
  %v1237 = vld [vmem:[%s0 + $0x20] sm:$0xff]
  %v1238 = vld [vmem:[%s0 + $0x28] sm:$0xff]
  %v1239 = vld [vmem:[%s0 + $0x30] sm:$0xff]
  %v1240 = vld [vmem:[%s0 + $0x38] sm:$0xff]
  %v1241 = vld [vmem:[%s6] sm:$0xff]
  %v1242 = vld [vmem:[%s6 + $0x8] sm:$0xff]
  %v1243 = vld [vmem:[%s7] sm:$0x1]
  %v1245 = vlaneseq
  %v1246 = vshrl.u32 %v1245, 7
  %v1247 = vsub.s32 0, %v1246
  %v1248 = vrot.slane %v1243, %v1247
  %v1251 = vsel %vm423, %v1233, 0
  %v1254 = vsel %vm423, %v1234, 0
  %v1257 = vsel %vm423, %v1235, 0
  %v1260 = vsel %vm423, %v1236, 0
  %v1263 = vsel %vm423, %v1237, 0
  %v1266 = vsel %vm423, %v1238, 0
  %v1269 = vsel %vm423, %v1239, 0
  %v1272 = vsel %vm423, %v1240, 0
  %1274 = vmatprep.subr.mxu0 0.0
  %1275 = vmatpush1.msra.mxu0 0.0
  %1276 = vmatprep.subr.mxu0 0.0
  %1277 = vmatpush1.msra.mxu0 0.0
  %1278 = vmatprep.subr.mxu0 0.0
  %1279 = vmatpush1.msra.mxu0 0.0
  %1280 = vmatprep.subr.mxu0 0.0
  %1281 = vmatpush1.msra.mxu0 0.0
  %1282 = vmatprep.subr.mxu0 0.0
  %1283 = vmatpush1.msra.mxu0 0.0
  %1284 = vmatprep.subr.mxu0 0.0
  %1285 = vmatpush1.msra.mxu0 0.0
  %1286 = vmatprep.subr.mxu0 0.0
  %1287 = vmatpush1.msra.mxu0 0.0
  %1288 = vmatprep.subr.mxu0 0.0
  %1289 = vmatpush1.msra.mxu0 0.0
  %1290 = vmatprep.subr.mxu0 0.0
  %1291 = vmatpush1.msra.mxu0 0.0
  %1292 = vmatprep.subr.mxu0 0.0
  %1293 = vmatpush1.msra.mxu0 0.0
  %1294 = vmatprep.subr.mxu0 0.0
  %1295 = vmatpush1.msra.mxu0 0.0
  %1296 = vmatprep.subr.mxu0 0.0
  %1297 = vmatpush1.msra.mxu0 0.0
  %1298 = vmatprep.subr.mxu0 0.0
  %1299 = vmatpush1.msra.mxu0 0.0
  %1300 = vmatprep.subr.mxu0 0.0
  %1301 = vmatpush1.msra.mxu0 0.0
  %1302 = vmatprep.subr.mxu0 0.0
  %1303 = vmatpush1.msra.mxu0 %v1242
  %1304 = vmatprep.subr.mxu0 0.0
  %1305 = vmatpush1.msra.mxu0 %v1241
  %1306 = vmatprep.subr.mxu0 0.0
  %1307 = vmatpush2.msra.mxu0 0.0
  %1308 = vmatprep.subr.mxu0 0.0
  %1309 = vmatpush2.msra.mxu0 0.0
  %1310 = vmatprep.subr.mxu0 0.0
  %1311 = vmatpush2.msra.mxu0 0.0
  %1312 = vmatprep.subr.mxu0 0.0
  %1313 = vmatpush2.msra.mxu0 0.0
  %1314 = vmatprep.subr.mxu0 0.0
  %1315 = vmatpush2.msra.mxu0 0.0
  %1316 = vmatprep.subr.mxu0 0.0
  %1317 = vmatpush2.msra.mxu0 0.0
  %1318 = vmatprep.subr.mxu0 0.0
  %1319 = vmatpush2.msra.mxu0 0.0
  %1320 = vmatprep.subr.mxu0 0.0
  %1321 = vmatpush2.msra.mxu0 0.0
  %1322 = vmatprep.subr.mxu0 0.0
  %1323 = vmatpush2.msra.mxu0 0.0
  %1324 = vmatprep.subr.mxu0 0.0
  %1325 = vmatpush2.msra.mxu0 0.0
  %1326 = vmatprep.subr.mxu0 0.0
  %1327 = vmatpush2.msra.mxu0 0.0
  %1328 = vmatprep.subr.mxu0 0.0
  %1329 = vmatpush2.msra.mxu0 0.0
  %1330 = vmatprep.subr.mxu0 0.0
  %1331 = vmatpush2.msra.mxu0 0.0
  %1332 = vmatprep.subr.mxu0 0.0
  %1333 = vmatpush2.msra.mxu0 0.0
  %1334 = vmatprep.subr.mxu0 0.0
  %1335 = vmatpush2.msra.mxu0 0.0
  %1336 = vmatprep.subr.mxu0 0.0
  %1337 = vmatpush2.msra.mxu0 0.0
  %1338 = vmatprep.mubr.f32.mxu0 0.0
  %1339 = vmatmul.mubr.f32.gmra.mxu0 %v1251
  %v1340 = vpop.f32.mrf.mxu0
  %v1341 = vadd.f32 %v1248, %v1340
  %v1342 = vpop.f32.mrf.mxu0
  %1343 = vmatprep.mubr.f32.mxu0 0.0
  %1344 = vmatmul.mubr.f32.gmra.mxu0 %v1254
  %v1345 = vpop.f32.mrf.mxu0
  %v1346 = vadd.f32 %v1248, %v1345
  %v1347 = vpop.f32.mrf.mxu0
  %1348 = vmatprep.mubr.f32.mxu0 0.0
  %1349 = vmatmul.mubr.f32.gmra.mxu0 %v1257
  %v1350 = vpop.f32.mrf.mxu0
  %v1351 = vadd.f32 %v1248, %v1350
  %v1352 = vpop.f32.mrf.mxu0
  %1353 = vmatprep.mubr.f32.mxu0 0.0
  %1354 = vmatmul.mubr.f32.gmra.mxu0 %v1260
  %v1355 = vpop.f32.mrf.mxu0
  %v1356 = vadd.f32 %v1248, %v1355
  %v1357 = vpop.f32.mrf.mxu0
  %1358 = vmatprep.mubr.f32.mxu0 0.0
  %1359 = vmatmul.mubr.f32.gmra.mxu0 %v1263
  %v1360 = vpop.f32.mrf.mxu0
  %v1361 = vadd.f32 %v1248, %v1360
  %v1362 = vpop.f32.mrf.mxu0
  %1363 = vmatprep.mubr.f32.mxu0 0.0
  %1364 = vmatmul.mubr.f32.gmra.mxu0 %v1266
  %v1365 = vpop.f32.mrf.mxu0
  %v1366 = vadd.f32 %v1248, %v1365
  %v1367 = vpop.f32.mrf.mxu0
  %1368 = vmatprep.mubr.f32.mxu0 0.0
  %1369 = vmatmul.mubr.f32.gmra.mxu0 %v1269
  %v1370 = vpop.f32.mrf.mxu0
  %v1371 = vadd.f32 %v1248, %v1370
  %v1372 = vpop.f32.mrf.mxu0
  %1373 = vmatprep.mubr.f32.mxu0 0.0
  %1374 = vmatmul.mubr.f32.gmra.mxu0 %v1272
  %v1375 = vpop.f32.mrf.mxu0
  %v1376 = vadd.f32 %v1248, %v1375
  %v1377 = vpop.f32.mrf.mxu0
  %1378 = vdwg.mxu0
  %v1379 = vmax.f32 %v1341, 0.0
  %v1380 = vmax.f32 %v1346, 0.0
  %v1381 = vmax.f32 %v1351, 0.0
  %v1382 = vmax.f32 %v1356, 0.0
  %v1383 = vmax.f32 %v1361, 0.0
  %v1384 = vmax.f32 %v1366, 0.0
  %v1385 = vmax.f32 %v1371, 0.0
  %v1386 = vmax.f32 %v1376, 0.0
  %v1387 = vadd.f32 %v1379, %v1225
  %v1388 = vadd.f32 %v1380, %v1226
  %v1389 = vadd.f32 %v1381, %v1227
  %v1390 = vadd.f32 %v1382, %v1228
  %v1391 = vadd.f32 %v1383, %v1229
  %v1392 = vadd.f32 %v1384, %v1230
  %v1393 = vadd.f32 %v1385, %v1231
  %v1394 = vadd.f32 %v1386, %v1232
  %1395 = vst.msk [vmem:[%s8] sm:$0xff] %vm423, %v1387
  %1396 = vst.msk [vmem:[%s8 + $0x8] sm:$0xff] %vm423, %v1388
  %1397 = vst.msk [vmem:[%s8 + $0x10] sm:$0xff] %vm423, %v1389
  %1398 = vst.msk [vmem:[%s8 + $0x18] sm:$0xff] %vm423, %v1390
  %1399 = vst.msk [vmem:[%s8 + $0x20] sm:$0xff] %vm423, %v1391
  %1400 = vst.msk [vmem:[%s8 + $0x28] sm:$0xff] %vm423, %v1392
  %1401 = vst.msk [vmem:[%s8 + $0x30] sm:$0xff] %vm423, %v1393
  %1402 = vst.msk [vmem:[%s8 + $0x38] sm:$0xff] %vm423, %v1394
  // Predicated region
  $region34: #{tpu_custom_call.1} parent=0 // pred_check
    _
  $region35: #{tpu_custom_call.1} parent=0 // pred_check_branch
    %1404 = sbr.rel (0) target = $region37
  $region36: #{tpu_custom_call.1} parent=0 // pred_region
    _
  $region37: #{tpu_custom_call.1} parent=0 // pred_fallthru
    _
  // Predicated region
  $region38: #{tpu_custom_call.1} parent=0 // pred_check
    _
  $region39: #{tpu_custom_call.1} parent=0 // pred_check_branch
    %1406 = sbr.rel (0) target = $region41
  $region40: #{tpu_custom_call.1} parent=0 // pred_region
    _
  $region41: #{tpu_custom_call.1} parent=0 // pred_fallthru
    _

</llo_original>
